<compile_context>
chip_gen: v7x
topology: tpu7x:2x2x1
jax: 0.10.0
libtpu: 0.0.40
codegen_flags: <defaults>
</compile_context>

<pallas_src>
import functools

import jax
import jax.numpy as jnp
from jax.experimental import pallas as pl
from jax.experimental.pallas import tpu as pltpu


# ----------------------------- configuration -----------------------------
STATE_DIM = 6
ACTION_DIM = 4
STATE_EMBED_DIM = 8
ACTION_EMBED_DIM = 8
REWARD_EMBED_DIM = 8
HIDDEN_SIZE = 32            # encoder_gru_hidden_size
LATENT_DIM = 5
AGG_INPUT_DIM = ACTION_EMBED_DIM + 2 * STATE_EMBED_DIM + REWARD_EMBED_DIM  # 32
RAW_INPUT_DIM = STATE_DIM + ACTION_DIM + 1 + STATE_DIM                      # 17
XSEQ_PAD_DIM = 32           # raw transition lane-padded to the matmul K dim
PARAM_ROWS = 200            # packed parameter slab rows (see _pack_params)
PARAM_LANES = 128

SEQ_LEN = 8
BATCH = 2

# TODO(synk): only the GRU aggregator path (encoder_type='gru', full_transitions)
# is implemented; 'max' aggregation / straight-through estimator / skip
# connections / unpadded_lens / detach_every are not.


# ------------------------------- the kernel -------------------------------
def rnn_encoder_kernel(
    xseq_ref,                    # (T*B, 32)  [prev_s | a | r | s | 0-pad], time-major
    p_ref,                       # (200, 128) packed parameter slab
    agg_out_ref,                 # ((T+1)*B, 128)  lane-padded [mean | logvar | 0-pad]
    hid_out_ref,                 # ((T+1)*B, H)
    *, seq_len, batch,
):
    T, B = seq_len, batch
    H = HIDDEN_SIZE
    relu = lambda v: jnp.maximum(v, 0.0)
    mm = lambda x, w: jnp.dot(x, w, preferred_element_type=jnp.float32)
    # sigmoid(x) == 0.5*(1 + tanh(x/2)) exactly; single EUP op on the serial chain.
    sigm = lambda v: 0.5 * (jnp.tanh(0.5 * v) + 1.0)

    # ---- unpack packed parameter slab (static, sublane-aligned slices; read once) ----
    w_feat = p_ref[0:32, 0:H]            # (32, 32) fused block-diag feature extractors
    w_fb   = p_ref[32:64, 0:H]           # (32, 32) fc_before_gru
    w_ih   = p_ref[64:96, 0:3 * H]       # (32, 96) GRU input weights  [r|z|n]
    w_hh   = p_ref[96:128, 0:3 * H]      # (32, 96) GRU hidden weights [r|z|n]
    w_fa   = p_ref[128:160, 0:H]         # (32, 32) fc_after_gru
    w_out  = p_ref[160:192, :]           # (32, 128) output head (lane-padded)
    b_feat = p_ref[192:193, 0:H]
    b_fb   = p_ref[193:194, 0:H]
    b_gi   = p_ref[194:195, 0:3 * H]     # bih + [bhh_r | bhh_z | 0]
    b_hhn  = p_ref[195:196, 0:H]
    b_fa   = p_ref[196:197, 0:H]
    b_out  = p_ref[197:198, :]

    # ---- hoisted, batched precompute over all T real timesteps (M = T*B) ----
    x_raw = xseq_ref[...]                                 # (T*B, 32)
    h_in  = relu(mm(x_raw, w_feat) + b_feat)              # (T*B, 32)
    x_pre = relu(mm(h_in, w_fb) + b_fb)                   # (T*B, 32)
    gi    = mm(x_pre, w_ih) + b_gi                        # (T*B, 96)  (bhh_r/z folded in)

    # ---- explicit prior step: zero aggregator input, zero init hidden ----
    x0 = relu(b_fb)                                       # fc_before_gru(0) = relu(bias)
    g0 = mm(x0, w_ih) + b_gi                              # (1, 96); h_prev == 0 => gh == 0
    r0 = sigm(g0[:, 0:H])
    z0 = sigm(g0[:, H:2 * H])
    n0 = jnp.tanh(g0[:, 2 * H:3 * H] + r0 * b_hhn)
    h_prior = (1.0 - z0) * n0                             # (+ z0 * 0); discarded from chain

    # ---- sequential GRU recurrence: ONE fused (B,32)@(32,96) MXU push per step ----
    head_blocks = [jnp.broadcast_to(h_prior, (B, H))]     # head input for prior row block
    hid_blocks = [jnp.zeros((B, H), jnp.float32)]         # hidden_states[0] = init (zeros)
    h = jnp.zeros((B, H), jnp.float32)
    for t in range(T):                                    # static unroll (T small & static)
        lo = t * B
        gh = mm(h, w_hh)                                  # (B, 96)
        gt = gi[lo:lo + B, :]                             # static sublane slice
        r = sigm(gt[:, 0:H] + gh[:, 0:H])
        z = sigm(gt[:, H:2 * H] + gh[:, H:2 * H])
        n = jnp.tanh(gt[:, 2 * H:3 * H] + r * (gh[:, 2 * H:3 * H] + b_hhn))
        h = (1.0 - z) * n + z * h
        head_blocks.append(h)
        hid_blocks.append(h)

    # ---- batched post-GRU layer + lane-padded head over all T+1 row-blocks ----
    h_head = jnp.concatenate(head_blocks, axis=0)         # ((T+1)*B, H), stays in vregs
    y = relu(mm(h_head, w_fa) + b_fa)
    agg_out_ref[...] = mm(y, w_out) + b_out               # single lane-dense (.,128) store

    hid_out_ref[...] = jnp.concatenate(hid_blocks, axis=0)  # single store; row 0 = init state


# ------------------------------ the wrapper -------------------------------
def _pack_params(params):
    """Fuse / pre-transpose / lane-pad all weights into one (200, 128) f32 slab."""
    H = HIDDEN_SIZE
    L2 = 2 * LATENT_DIM
    sd, ad, rd = STATE_DIM, ACTION_DIM, 1
    se, ae, re = STATE_EMBED_DIM, ACTION_EMBED_DIM, REWARD_EMBED_DIM

    # fused block-diagonal feature extractor: input order [prev_s | a | r | s],
    # output order [hs_prev | ha | hr | hs_next]  (state encoder shared); rows padded to 32.
    w_feat = jnp.zeros((32, AGG_INPUT_DIM), jnp.float32)
    w_feat = w_feat.at[0:sd, 0:se].set(params["Ws"].T)
    w_feat = w_feat.at[sd:sd + ad, se:se + ae].set(params["Wa"].T)
    w_feat = w_feat.at[sd + ad:sd + ad + rd, se + ae:se + ae + re].set(params["Wr"].T)
    w_feat = w_feat.at[sd + ad + rd:RAW_INPUT_DIM, se + ae + re:].set(params["Ws"].T)
    b_feat = jnp.concatenate(
        [params["bs"], params["ba"], params["br"], params["bs"]], axis=-1)

    # GRU (PyTorch nn.GRU layout [r; z; n]): pre-transposed fused (32, 96) weights;
    # bhh_r / bhh_z folded into the input-side bias (bhh_n stays inside r*(.)).
    w_ih_all = params["Wih"].T                             # (32, 96)
    w_hh_all = params["Whh"].T                             # (32, 96)
    bih, bhh = params["bih"], params["bhh"]                # (1, 96)
    b_gi = bih + jnp.concatenate(
        [bhh[:, 0:H], bhh[:, H:2 * H], jnp.zeros((1, H), jnp.float32)], axis=-1)
    b_hhn = bhh[:, 2 * H:3 * H]

    slab = jnp.zeros((PARAM_ROWS, PARAM_LANES), jnp.float32)
    slab = slab.at[0:32, 0:H].set(w_feat)
    slab = slab.at[32:64, 0:H].set(params["Wfb"].T)
    slab = slab.at[64:96, 0:3 * H].set(w_ih_all)
    slab = slab.at[96:128, 0:3 * H].set(w_hh_all)
    slab = slab.at[128:160, 0:H].set(params["Wfa"].T)
    slab = slab.at[160:192, 0:L2].set(params["Wout"].T)    # lane-padded output head
    slab = slab.at[192, 0:H].set(b_feat[0])
    slab = slab.at[193, 0:H].set(params["bfb"][0])
    slab = slab.at[194, 0:3 * H].set(b_gi[0])
    slab = slab.at[195, 0:H].set(b_hhn[0])
    slab = slab.at[196, 0:H].set(params["bfa"][0])
    slab = slab.at[197, 0:L2].set(params["bout"][0])
    return slab


def rnn_encoder_forward(params, actions, states, rewards, prev_states,
                        sample_key, sample=True):
    """Forward pass with return_prior=True, return_all_hidden=True."""
    T, B, _ = actions.shape
    H = HIDDEN_SIZE
    L2 = 2 * LATENT_DIM

    # wrapper-side layout plumbing: concat raw transitions, flatten time-major,
    # lane-pad the K dim of the first matmul to 32.
    xseq = jnp.concatenate([prev_states, actions, rewards, states], axis=-1)
    xseq = xseq.reshape(T * B, RAW_INPUT_DIM).astype(jnp.float32)
    xseq = jnp.pad(xseq, ((0, 0), (0, XSEQ_PAD_DIM - RAW_INPUT_DIM)))

    pslab = _pack_params(params)

    kernel = functools.partial(rnn_encoder_kernel, seq_len=T, batch=B)
    agg_pad, hid_flat = pl.pallas_call(
        kernel,
        out_shape=(
            jax.ShapeDtypeStruct(((T + 1) * B, PARAM_LANES), jnp.float32),
            jax.ShapeDtypeStruct(((T + 1) * B, H), jnp.float32),
        ),
        grid=(1,),
        in_specs=[
            pl.BlockSpec((T * B, XSEQ_PAD_DIM), lambda i: (0, 0)),
            pl.BlockSpec((PARAM_ROWS, PARAM_LANES), lambda i: (0, 0)),
        ],
        out_specs=(
            pl.BlockSpec(((T + 1) * B, PARAM_LANES), lambda i: (0, 0)),
            pl.BlockSpec(((T + 1) * B, H), lambda i: (0, 0)),
        ),
        compiler_params=pltpu.CompilerParams(
            dimension_semantics=("arbitrary",)),
    )(xseq, pslab)

    agg_outputs = agg_pad[:, :L2].reshape(T + 1, B, L2)
    hidden_states = hid_flat.reshape(T + 1, B, H)

    latent_mean, latent_logvar = jnp.split(agg_outputs, 2, axis=-1)
    if sample:
        eps = jax.random.normal(sample_key, latent_mean.shape, jnp.float32)
        latent_sample = latent_mean + eps * jnp.exp(0.5 * latent_logvar)
    else:
        latent_sample = latent_mean

    if latent_mean.shape[0] == 1:
        latent_sample, latent_mean, latent_logvar = (
            latent_sample[0], latent_mean[0], latent_logvar[0])

    return latent_sample, latent_mean, latent_logvar, hidden_states


# ----------------------- deterministic parameter init ----------------------
def _linear(key, out_dim, in_dim, scale=0.1):
    kw, kb = jax.random.split(key)
    w = scale * jax.random.normal(kw, (out_dim, in_dim), jnp.float32)
    b = scale * jax.random.normal(kb, (1, out_dim), jnp.float32)
    return w, b


def init_params(key):
    keys = jax.random.split(key, 8)
    p = {}
    p["Wa"], p["ba"] = _linear(keys[0], ACTION_EMBED_DIM, ACTION_DIM)
    p["Ws"], p["bs"] = _linear(keys[1], STATE_EMBED_DIM, STATE_DIM)
    p["Wr"], p["br"] = _linear(keys[2], REWARD_EMBED_DIM, 1)
    p["Wfb"], p["bfb"] = _linear(keys[3], AGG_INPUT_DIM, AGG_INPUT_DIM)
    p["Wih"], p["bih"] = _linear(keys[4], 3 * HIDDEN_SIZE, AGG_INPUT_DIM)
    p["Whh"], p["bhh"] = _linear(keys[5], 3 * HIDDEN_SIZE, HIDDEN_SIZE)
    p["Wfa"], p["bfa"] = _linear(keys[6], HIDDEN_SIZE, HIDDEN_SIZE)
    p["Wout"], p["bout"] = _linear(keys[7], 2 * LATENT_DIM, HIDDEN_SIZE)
    return p


# ---------------------------------- main -----------------------------------
if __name__ == "__main__":
    root = jax.random.PRNGKey(0)
    k_par, k_a, k_s, k_ps, k_r, k_eps = jax.random.split(root, 6)

    params = init_params(k_par)

    actions = jax.random.normal(k_a, (SEQ_LEN, BATCH, ACTION_DIM), jnp.float32)
    states = jax.random.normal(k_s, (SEQ_LEN, BATCH, STATE_DIM), jnp.float32)
    prev_states = jax.random.normal(k_ps, (SEQ_LEN, BATCH, STATE_DIM),
                                    jnp.float32)
    rewards = jax.random.normal(k_r, (SEQ_LEN, BATCH, 1), jnp.float32)

    fwd = jax.jit(functools.partial(rnn_encoder_forward, sample=True))
    latent_sample, latent_mean, latent_logvar, hidden_states = fwd(
        params, actions, states, rewards, prev_states, k_eps)

    jax.block_until_ready(
        (latent_sample, latent_mean, latent_logvar, hidden_states))

    assert latent_sample.shape == (SEQ_LEN + 1, BATCH, LATENT_DIM)
    assert latent_mean.shape == (SEQ_LEN + 1, BATCH, LATENT_DIM)
    assert latent_logvar.shape == (SEQ_LEN + 1, BATCH, LATENT_DIM)
    assert hidden_states.shape == (SEQ_LEN + 1, BATCH, HIDDEN_SIZE)
    assert bool(jnp.all(jnp.isfinite(latent_mean)))
    assert bool(jnp.all(jnp.isfinite(hidden_states)))
    # prior hidden state (index 0) must equal the init state (zeros)
    assert bool(jnp.all(hidden_states[0] == 0.0))

    print("KERNEL_OK")
</pallas_src>

<mosaic_0001>
module attributes {stable_mosaic.version = 11 : i64} {
  func.func @rnn_encoder_kernel(%arg0: i32, %arg1: memref<16x32xf32, #tpu.memory_space<vmem>>, %arg2: memref<200x128xf32, #tpu.memory_space<vmem>>, %arg3: memref<18x128xf32, #tpu.memory_space<vmem>>, %arg4: memref<18x32xf32, #tpu.memory_space<vmem>>) attributes {dimension_semantics = [#tpu.dimension_semantics<arbitrary>], iteration_bounds = array<i64: 1>, scalar_prefetch = 0 : i64, scratch_operands = 0 : i64, tpu.core_type = #tpu.core_type<tc>, window_params = [{pipeline_mode = #tpu.pipeline_mode<synchronous>, transform_indices = @transform_0, window_bounds = array<i64: 16, 32>}, {pipeline_mode = #tpu.pipeline_mode<synchronous>, transform_indices = @transform_1, window_bounds = array<i64: 200, 128>}, {pipeline_mode = #tpu.pipeline_mode<synchronous>, transform_indices = @transform_2, window_bounds = array<i64: 18, 128>}, {pipeline_mode = #tpu.pipeline_mode<synchronous>, transform_indices = @transform_3, window_bounds = array<i64: 18, 32>}]} {
    %c0 = arith.constant 0 : index
    %c0_0 = arith.constant 0 : index
    %0 = vector.load %arg2[%c0, %c0_0] : memref<200x128xf32, #tpu.memory_space<vmem>>, vector<32x32xf32>
    %c32 = arith.constant 32 : index
    %c0_1 = arith.constant 0 : index
    %1 = vector.load %arg2[%c32, %c0_1] : memref<200x128xf32, #tpu.memory_space<vmem>>, vector<32x32xf32>
    %c64 = arith.constant 64 : index
    %c0_2 = arith.constant 0 : index
    %2 = vector.load %arg2[%c64, %c0_2] : memref<200x128xf32, #tpu.memory_space<vmem>>, vector<32x96xf32>
    %c96 = arith.constant 96 : index
    %c0_3 = arith.constant 0 : index
    %3 = vector.load %arg2[%c96, %c0_3] : memref<200x128xf32, #tpu.memory_space<vmem>>, vector<32x96xf32>
    %c128 = arith.constant 128 : index
    %c0_4 = arith.constant 0 : index
    %4 = vector.load %arg2[%c128, %c0_4] : memref<200x128xf32, #tpu.memory_space<vmem>>, vector<32x32xf32>
    %c160 = arith.constant 160 : index
    %c0_5 = arith.constant 0 : index
    %5 = vector.load %arg2[%c160, %c0_5] : memref<200x128xf32, #tpu.memory_space<vmem>>, vector<32x128xf32>
    %c192 = arith.constant 192 : index
    %c0_6 = arith.constant 0 : index
    %6 = vector.load %arg2[%c192, %c0_6] : memref<200x128xf32, #tpu.memory_space<vmem>>, vector<1x32xf32>
    %c193 = arith.constant 193 : index
    %c0_7 = arith.constant 0 : index
    %7 = vector.load %arg2[%c193, %c0_7] : memref<200x128xf32, #tpu.memory_space<vmem>>, vector<1x32xf32>
    %c194 = arith.constant 194 : index
    %c0_8 = arith.constant 0 : index
    %8 = vector.load %arg2[%c194, %c0_8] : memref<200x128xf32, #tpu.memory_space<vmem>>, vector<1x96xf32>
    %c195 = arith.constant 195 : index
    %c0_9 = arith.constant 0 : index
    %9 = vector.load %arg2[%c195, %c0_9] : memref<200x128xf32, #tpu.memory_space<vmem>>, vector<1x32xf32>
    %c196 = arith.constant 196 : index
    %c0_10 = arith.constant 0 : index
    %10 = vector.load %arg2[%c196, %c0_10] : memref<200x128xf32, #tpu.memory_space<vmem>>, vector<1x32xf32>
    %c197 = arith.constant 197 : index
    %c0_11 = arith.constant 0 : index
    %11 = vector.load %arg2[%c197, %c0_11] : memref<200x128xf32, #tpu.memory_space<vmem>>, vector<1x128xf32>
    %c0_12 = arith.constant 0 : index
    %c0_13 = arith.constant 0 : index
    %12 = vector.load %arg1[%c0_12, %c0_13] : memref<16x32xf32, #tpu.memory_space<vmem>>, vector<16x32xf32>
    %cst = arith.constant dense<0.000000e+00> : vector<16x32xf32>
    %13 = tpu.matmul %12, %0, %cst {dimension_numbers = #tpu.dot_dimension_numbers<[1], [0], [0], [1], [0, 0, 1, 1], [], []>} : vector<16x32xf32>, vector<32x32xf32>, vector<16x32xf32> -> vector<16x32xf32>
    %14 = vector.broadcast %6 : vector<1x32xf32> to vector<16x32xf32>
    %15 = arith.addf %13, %14 : vector<16x32xf32>
    %cst_14 = arith.constant 0.000000e+00 : f32
    %16 = vector.broadcast %cst_14 : f32 to vector<16x32xf32>
    %17 = arith.maximumf %15, %16 : vector<16x32xf32>
    %cst_15 = arith.constant dense<0.000000e+00> : vector<16x32xf32>
    %18 = tpu.matmul %17, %1, %cst_15 {dimension_numbers = #tpu.dot_dimension_numbers<[1], [0], [0], [1], [0, 0, 1, 1], [], []>} : vector<16x32xf32>, vector<32x32xf32>, vector<16x32xf32> -> vector<16x32xf32>
    %19 = vector.broadcast %7 : vector<1x32xf32> to vector<16x32xf32>
    %20 = arith.addf %18, %19 : vector<16x32xf32>
    %cst_16 = arith.constant 0.000000e+00 : f32
    %21 = vector.broadcast %cst_16 : f32 to vector<16x32xf32>
    %22 = arith.maximumf %20, %21 : vector<16x32xf32>
    %cst_17 = arith.constant dense<0.000000e+00> : vector<16x96xf32>
    %23 = tpu.matmul %22, %2, %cst_17 {dimension_numbers = #tpu.dot_dimension_numbers<[1], [0], [0], [1], [0, 0, 1, 1], [], []>} : vector<16x32xf32>, vector<32x96xf32>, vector<16x96xf32> -> vector<16x96xf32>
    %24 = vector.broadcast %8 : vector<1x96xf32> to vector<16x96xf32>
    %25 = arith.addf %23, %24 : vector<16x96xf32>
    %cst_18 = arith.constant 0.000000e+00 : f32
    %26 = vector.broadcast %cst_18 : f32 to vector<1x32xf32>
    %27 = arith.maximumf %7, %26 : vector<1x32xf32>
    %cst_19 = arith.constant dense<0.000000e+00> : vector<1x96xf32>
    %28 = tpu.matmul %27, %2, %cst_19 {dimension_numbers = #tpu.dot_dimension_numbers<[1], [0], [0], [1], [0, 0, 1, 1], [], []>} : vector<1x32xf32>, vector<32x96xf32>, vector<1x96xf32> -> vector<1x96xf32>
    %29 = arith.addf %28, %8 : vector<1x96xf32>
    %30 = vector.extract_strided_slice %29 {offsets = [0, 0], sizes = [1, 32], strides = [1, 1]} : vector<1x96xf32> to vector<1x32xf32>
    %cst_20 = arith.constant 5.000000e-01 : f32
    %31 = vector.broadcast %cst_20 : f32 to vector<1x32xf32>
    %32 = arith.mulf %31, %30 : vector<1x32xf32>
    %33 = math.tanh %32 : vector<1x32xf32>
    %cst_21 = arith.constant 1.000000e+00 : f32
    %34 = vector.broadcast %cst_21 : f32 to vector<1x32xf32>
    %35 = arith.addf %33, %34 : vector<1x32xf32>
    %cst_22 = arith.constant 5.000000e-01 : f32
    %36 = vector.broadcast %cst_22 : f32 to vector<1x32xf32>
    %37 = arith.mulf %36, %35 : vector<1x32xf32>
    %38 = vector.extract_strided_slice %29 {offsets = [0, 32], sizes = [1, 32], strides = [1, 1]} : vector<1x96xf32> to vector<1x32xf32>
    %cst_23 = arith.constant 5.000000e-01 : f32
    %39 = vector.broadcast %cst_23 : f32 to vector<1x32xf32>
    %40 = arith.mulf %39, %38 : vector<1x32xf32>
    %41 = math.tanh %40 : vector<1x32xf32>
    %cst_24 = arith.constant 1.000000e+00 : f32
    %42 = vector.broadcast %cst_24 : f32 to vector<1x32xf32>
    %43 = arith.addf %41, %42 : vector<1x32xf32>
    %cst_25 = arith.constant 5.000000e-01 : f32
    %44 = vector.broadcast %cst_25 : f32 to vector<1x32xf32>
    %45 = arith.mulf %44, %43 : vector<1x32xf32>
    %46 = vector.extract_strided_slice %29 {offsets = [0, 64], sizes = [1, 32], strides = [1, 1]} : vector<1x96xf32> to vector<1x32xf32>
    %47 = arith.mulf %37, %9 : vector<1x32xf32>
    %48 = arith.addf %46, %47 : vector<1x32xf32>
    %49 = math.tanh %48 : vector<1x32xf32>
    %cst_26 = arith.constant 1.000000e+00 : f32
    %50 = vector.broadcast %cst_26 : f32 to vector<1x32xf32>
    %51 = arith.subf %50, %45 : vector<1x32xf32>
    %52 = arith.mulf %51, %49 : vector<1x32xf32>
    %53 = vector.shape_cast %52 : vector<1x32xf32> to vector<1x32xf32>
    %54 = vector.broadcast %53 : vector<1x32xf32> to vector<2x32xf32>
    %cst_27 = arith.constant 0.000000e+00 : f32
    %55 = vector.broadcast %cst_27 : f32 to vector<2x32xf32>
    %cst_28 = arith.constant 0.000000e+00 : f32
    %56 = vector.broadcast %cst_28 : f32 to vector<2x32xf32>
    %cst_29 = arith.constant dense<0.000000e+00> : vector<2x96xf32>
    %57 = tpu.matmul %56, %3, %cst_29 {dimension_numbers = #tpu.dot_dimension_numbers<[1], [0], [0], [1], [0, 0, 1, 1], [], []>} : vector<2x32xf32>, vector<32x96xf32>, vector<2x96xf32> -> vector<2x96xf32>
    %58 = vector.extract_strided_slice %25 {offsets = [0, 0], sizes = [2, 96], strides = [1, 1]} : vector<16x96xf32> to vector<2x96xf32>
    %59 = vector.extract_strided_slice %58 {offsets = [0, 0], sizes = [2, 32], strides = [1, 1]} : vector<2x96xf32> to vector<2x32xf32>
    %60 = vector.extract_strided_slice %57 {offsets = [0, 0], sizes = [2, 32], strides = [1, 1]} : vector<2x96xf32> to vector<2x32xf32>
    %61 = arith.addf %59, %60 : vector<2x32xf32>
    %cst_30 = arith.constant 5.000000e-01 : f32
    %62 = vector.broadcast %cst_30 : f32 to vector<2x32xf32>
    %63 = arith.mulf %62, %61 : vector<2x32xf32>
    %64 = math.tanh %63 : vector<2x32xf32>
    %cst_31 = arith.constant 1.000000e+00 : f32
    %65 = vector.broadcast %cst_31 : f32 to vector<2x32xf32>
    %66 = arith.addf %64, %65 : vector<2x32xf32>
    %cst_32 = arith.constant 5.000000e-01 : f32
    %67 = vector.broadcast %cst_32 : f32 to vector<2x32xf32>
    %68 = arith.mulf %67, %66 : vector<2x32xf32>
    %69 = vector.extract_strided_slice %58 {offsets = [0, 32], sizes = [2, 32], strides = [1, 1]} : vector<2x96xf32> to vector<2x32xf32>
    %70 = vector.extract_strided_slice %57 {offsets = [0, 32], sizes = [2, 32], strides = [1, 1]} : vector<2x96xf32> to vector<2x32xf32>
    %71 = arith.addf %69, %70 : vector<2x32xf32>
    %cst_33 = arith.constant 5.000000e-01 : f32
    %72 = vector.broadcast %cst_33 : f32 to vector<2x32xf32>
    %73 = arith.mulf %72, %71 : vector<2x32xf32>
    %74 = math.tanh %73 : vector<2x32xf32>
    %cst_34 = arith.constant 1.000000e+00 : f32
    %75 = vector.broadcast %cst_34 : f32 to vector<2x32xf32>
    %76 = arith.addf %74, %75 : vector<2x32xf32>
    %cst_35 = arith.constant 5.000000e-01 : f32
    %77 = vector.broadcast %cst_35 : f32 to vector<2x32xf32>
    %78 = arith.mulf %77, %76 : vector<2x32xf32>
    %79 = vector.extract_strided_slice %58 {offsets = [0, 64], sizes = [2, 32], strides = [1, 1]} : vector<2x96xf32> to vector<2x32xf32>
    %80 = vector.extract_strided_slice %57 {offsets = [0, 64], sizes = [2, 32], strides = [1, 1]} : vector<2x96xf32> to vector<2x32xf32>
    %81 = vector.broadcast %9 : vector<1x32xf32> to vector<2x32xf32>
    %82 = arith.addf %80, %81 : vector<2x32xf32>
    %83 = arith.mulf %68, %82 : vector<2x32xf32>
    %84 = arith.addf %79, %83 : vector<2x32xf32>
    %85 = math.tanh %84 : vector<2x32xf32>
    %cst_36 = arith.constant 1.000000e+00 : f32
    %86 = vector.broadcast %cst_36 : f32 to vector<2x32xf32>
    %87 = arith.subf %86, %78 : vector<2x32xf32>
    %88 = arith.mulf %87, %85 : vector<2x32xf32>
    %89 = arith.mulf %78, %56 : vector<2x32xf32>
    %90 = arith.addf %88, %89 : vector<2x32xf32>
    %cst_37 = arith.constant dense<0.000000e+00> : vector<2x96xf32>
    %91 = tpu.matmul %90, %3, %cst_37 {dimension_numbers = #tpu.dot_dimension_numbers<[1], [0], [0], [1], [0, 0, 1, 1], [], []>} : vector<2x32xf32>, vector<32x96xf32>, vector<2x96xf32> -> vector<2x96xf32>
    %92 = vector.extract_strided_slice %25 {offsets = [2, 0], sizes = [2, 96], strides = [1, 1]} : vector<16x96xf32> to vector<2x96xf32>
    %93 = vector.extract_strided_slice %92 {offsets = [0, 0], sizes = [2, 32], strides = [1, 1]} : vector<2x96xf32> to vector<2x32xf32>
    %94 = vector.extract_strided_slice %91 {offsets = [0, 0], sizes = [2, 32], strides = [1, 1]} : vector<2x96xf32> to vector<2x32xf32>
    %95 = arith.addf %93, %94 : vector<2x32xf32>
    %cst_38 = arith.constant 5.000000e-01 : f32
    %96 = vector.broadcast %cst_38 : f32 to vector<2x32xf32>
    %97 = arith.mulf %96, %95 : vector<2x32xf32>
    %98 = math.tanh %97 : vector<2x32xf32>
    %cst_39 = arith.constant 1.000000e+00 : f32
    %99 = vector.broadcast %cst_39 : f32 to vector<2x32xf32>
    %100 = arith.addf %98, %99 : vector<2x32xf32>
    %cst_40 = arith.constant 5.000000e-01 : f32
    %101 = vector.broadcast %cst_40 : f32 to vector<2x32xf32>
    %102 = arith.mulf %101, %100 : vector<2x32xf32>
    %103 = vector.extract_strided_slice %92 {offsets = [0, 32], sizes = [2, 32], strides = [1, 1]} : vector<2x96xf32> to vector<2x32xf32>
    %104 = vector.extract_strided_slice %91 {offsets = [0, 32], sizes = [2, 32], strides = [1, 1]} : vector<2x96xf32> to vector<2x32xf32>
    %105 = arith.addf %103, %104 : vector<2x32xf32>
    %cst_41 = arith.constant 5.000000e-01 : f32
    %106 = vector.broadcast %cst_41 : f32 to vector<2x32xf32>
    %107 = arith.mulf %106, %105 : vector<2x32xf32>
    %108 = math.tanh %107 : vector<2x32xf32>
    %cst_42 = arith.constant 1.000000e+00 : f32
    %109 = vector.broadcast %cst_42 : f32 to vector<2x32xf32>
    %110 = arith.addf %108, %109 : vector<2x32xf32>
    %cst_43 = arith.constant 5.000000e-01 : f32
    %111 = vector.broadcast %cst_43 : f32 to vector<2x32xf32>
    %112 = arith.mulf %111, %110 : vector<2x32xf32>
    %113 = vector.extract_strided_slice %92 {offsets = [0, 64], sizes = [2, 32], strides = [1, 1]} : vector<2x96xf32> to vector<2x32xf32>
    %114 = vector.extract_strided_slice %91 {offsets = [0, 64], sizes = [2, 32], strides = [1, 1]} : vector<2x96xf32> to vector<2x32xf32>
    %115 = vector.broadcast %9 : vector<1x32xf32> to vector<2x32xf32>
    %116 = arith.addf %114, %115 : vector<2x32xf32>
    %117 = arith.mulf %102, %116 : vector<2x32xf32>
    %118 = arith.addf %113, %117 : vector<2x32xf32>
    %119 = math.tanh %118 : vector<2x32xf32>
    %cst_44 = arith.constant 1.000000e+00 : f32
    %120 = vector.broadcast %cst_44 : f32 to vector<2x32xf32>
    %121 = arith.subf %120, %112 : vector<2x32xf32>
    %122 = arith.mulf %121, %119 : vector<2x32xf32>
    %123 = arith.mulf %112, %90 : vector<2x32xf32>
    %124 = arith.addf %122, %123 : vector<2x32xf32>
    %cst_45 = arith.constant dense<0.000000e+00> : vector<2x96xf32>
    %125 = tpu.matmul %124, %3, %cst_45 {dimension_numbers = #tpu.dot_dimension_numbers<[1], [0], [0], [1], [0, 0, 1, 1], [], []>} : vector<2x32xf32>, vector<32x96xf32>, vector<2x96xf32> -> vector<2x96xf32>
    %126 = vector.extract_strided_slice %25 {offsets = [4, 0], sizes = [2, 96], strides = [1, 1]} : vector<16x96xf32> to vector<2x96xf32>
    %127 = vector.extract_strided_slice %126 {offsets = [0, 0], sizes = [2, 32], strides = [1, 1]} : vector<2x96xf32> to vector<2x32xf32>
    %128 = vector.extract_strided_slice %125 {offsets = [0, 0], sizes = [2, 32], strides = [1, 1]} : vector<2x96xf32> to vector<2x32xf32>
    %129 = arith.addf %127, %128 : vector<2x32xf32>
    %cst_46 = arith.constant 5.000000e-01 : f32
    %130 = vector.broadcast %cst_46 : f32 to vector<2x32xf32>
    %131 = arith.mulf %130, %129 : vector<2x32xf32>
    %132 = math.tanh %131 : vector<2x32xf32>
    %cst_47 = arith.constant 1.000000e+00 : f32
    %133 = vector.broadcast %cst_47 : f32 to vector<2x32xf32>
    %134 = arith.addf %132, %133 : vector<2x32xf32>
    %cst_48 = arith.constant 5.000000e-01 : f32
    %135 = vector.broadcast %cst_48 : f32 to vector<2x32xf32>
    %136 = arith.mulf %135, %134 : vector<2x32xf32>
    %137 = vector.extract_strided_slice %126 {offsets = [0, 32], sizes = [2, 32], strides = [1, 1]} : vector<2x96xf32> to vector<2x32xf32>
    %138 = vector.extract_strided_slice %125 {offsets = [0, 32], sizes = [2, 32], strides = [1, 1]} : vector<2x96xf32> to vector<2x32xf32>
    %139 = arith.addf %137, %138 : vector<2x32xf32>
    %cst_49 = arith.constant 5.000000e-01 : f32
    %140 = vector.broadcast %cst_49 : f32 to vector<2x32xf32>
    %141 = arith.mulf %140, %139 : vector<2x32xf32>
    %142 = math.tanh %141 : vector<2x32xf32>
    %cst_50 = arith.constant 1.000000e+00 : f32
    %143 = vector.broadcast %cst_50 : f32 to vector<2x32xf32>
    %144 = arith.addf %142, %143 : vector<2x32xf32>
    %cst_51 = arith.constant 5.000000e-01 : f32
    %145 = vector.broadcast %cst_51 : f32 to vector<2x32xf32>
    %146 = arith.mulf %145, %144 : vector<2x32xf32>
    %147 = vector.extract_strided_slice %126 {offsets = [0, 64], sizes = [2, 32], strides = [1, 1]} : vector<2x96xf32> to vector<2x32xf32>
    %148 = vector.extract_strided_slice %125 {offsets = [0, 64], sizes = [2, 32], strides = [1, 1]} : vector<2x96xf32> to vector<2x32xf32>
    %149 = vector.broadcast %9 : vector<1x32xf32> to vector<2x32xf32>
    %150 = arith.addf %148, %149 : vector<2x32xf32>
    %151 = arith.mulf %136, %150 : vector<2x32xf32>
    %152 = arith.addf %147, %151 : vector<2x32xf32>
    %153 = math.tanh %152 : vector<2x32xf32>
    %cst_52 = arith.constant 1.000000e+00 : f32
    %154 = vector.broadcast %cst_52 : f32 to vector<2x32xf32>
    %155 = arith.subf %154, %146 : vector<2x32xf32>
    %156 = arith.mulf %155, %153 : vector<2x32xf32>
    %157 = arith.mulf %146, %124 : vector<2x32xf32>
    %158 = arith.addf %156, %157 : vector<2x32xf32>
    %cst_53 = arith.constant dense<0.000000e+00> : vector<2x96xf32>
    %159 = tpu.matmul %158, %3, %cst_53 {dimension_numbers = #tpu.dot_dimension_numbers<[1], [0], [0], [1], [0, 0, 1, 1], [], []>} : vector<2x32xf32>, vector<32x96xf32>, vector<2x96xf32> -> vector<2x96xf32>
    %160 = vector.extract_strided_slice %25 {offsets = [6, 0], sizes = [2, 96], strides = [1, 1]} : vector<16x96xf32> to vector<2x96xf32>
    %161 = vector.extract_strided_slice %160 {offsets = [0, 0], sizes = [2, 32], strides = [1, 1]} : vector<2x96xf32> to vector<2x32xf32>
    %162 = vector.extract_strided_slice %159 {offsets = [0, 0], sizes = [2, 32], strides = [1, 1]} : vector<2x96xf32> to vector<2x32xf32>
    %163 = arith.addf %161, %162 : vector<2x32xf32>
    %cst_54 = arith.constant 5.000000e-01 : f32
    %164 = vector.broadcast %cst_54 : f32 to vector<2x32xf32>
    %165 = arith.mulf %164, %163 : vector<2x32xf32>
    %166 = math.tanh %165 : vector<2x32xf32>
    %cst_55 = arith.constant 1.000000e+00 : f32
    %167 = vector.broadcast %cst_55 : f32 to vector<2x32xf32>
    %168 = arith.addf %166, %167 : vector<2x32xf32>
    %cst_56 = arith.constant 5.000000e-01 : f32
    %169 = vector.broadcast %cst_56 : f32 to vector<2x32xf32>
    %170 = arith.mulf %169, %168 : vector<2x32xf32>
    %171 = vector.extract_strided_slice %160 {offsets = [0, 32], sizes = [2, 32], strides = [1, 1]} : vector<2x96xf32> to vector<2x32xf32>
    %172 = vector.extract_strided_slice %159 {offsets = [0, 32], sizes = [2, 32], strides = [1, 1]} : vector<2x96xf32> to vector<2x32xf32>
    %173 = arith.addf %171, %172 : vector<2x32xf32>
    %cst_57 = arith.constant 5.000000e-01 : f32
    %174 = vector.broadcast %cst_57 : f32 to vector<2x32xf32>
    %175 = arith.mulf %174, %173 : vector<2x32xf32>
    %176 = math.tanh %175 : vector<2x32xf32>
    %cst_58 = arith.constant 1.000000e+00 : f32
    %177 = vector.broadcast %cst_58 : f32 to vector<2x32xf32>
    %178 = arith.addf %176, %177 : vector<2x32xf32>
    %cst_59 = arith.constant 5.000000e-01 : f32
    %179 = vector.broadcast %cst_59 : f32 to vector<2x32xf32>
    %180 = arith.mulf %179, %178 : vector<2x32xf32>
    %181 = vector.extract_strided_slice %160 {offsets = [0, 64], sizes = [2, 32], strides = [1, 1]} : vector<2x96xf32> to vector<2x32xf32>
    %182 = vector.extract_strided_slice %159 {offsets = [0, 64], sizes = [2, 32], strides = [1, 1]} : vector<2x96xf32> to vector<2x32xf32>
    %183 = vector.broadcast %9 : vector<1x32xf32> to vector<2x32xf32>
    %184 = arith.addf %182, %183 : vector<2x32xf32>
    %185 = arith.mulf %170, %184 : vector<2x32xf32>
    %186 = arith.addf %181, %185 : vector<2x32xf32>
    %187 = math.tanh %186 : vector<2x32xf32>
    %cst_60 = arith.constant 1.000000e+00 : f32
    %188 = vector.broadcast %cst_60 : f32 to vector<2x32xf32>
    %189 = arith.subf %188, %180 : vector<2x32xf32>
    %190 = arith.mulf %189, %187 : vector<2x32xf32>
    %191 = arith.mulf %180, %158 : vector<2x32xf32>
    %192 = arith.addf %190, %191 : vector<2x32xf32>
    %cst_61 = arith.constant dense<0.000000e+00> : vector<2x96xf32>
    %193 = tpu.matmul %192, %3, %cst_61 {dimension_numbers = #tpu.dot_dimension_numbers<[1], [0], [0], [1], [0, 0, 1, 1], [], []>} : vector<2x32xf32>, vector<32x96xf32>, vector<2x96xf32> -> vector<2x96xf32>
    %194 = vector.extract_strided_slice %25 {offsets = [8, 0], sizes = [2, 96], strides = [1, 1]} : vector<16x96xf32> to vector<2x96xf32>
    %195 = vector.extract_strided_slice %194 {offsets = [0, 0], sizes = [2, 32], strides = [1, 1]} : vector<2x96xf32> to vector<2x32xf32>
    %196 = vector.extract_strided_slice %193 {offsets = [0, 0], sizes = [2, 32], strides = [1, 1]} : vector<2x96xf32> to vector<2x32xf32>
    %197 = arith.addf %195, %196 : vector<2x32xf32>
    %cst_62 = arith.constant 5.000000e-01 : f32
    %198 = vector.broadcast %cst_62 : f32 to vector<2x32xf32>
    %199 = arith.mulf %198, %197 : vector<2x32xf32>
    %200 = math.tanh %199 : vector<2x32xf32>
    %cst_63 = arith.constant 1.000000e+00 : f32
    %201 = vector.broadcast %cst_63 : f32 to vector<2x32xf32>
    %202 = arith.addf %200, %201 : vector<2x32xf32>
    %cst_64 = arith.constant 5.000000e-01 : f32
    %203 = vector.broadcast %cst_64 : f32 to vector<2x32xf32>
    %204 = arith.mulf %203, %202 : vector<2x32xf32>
    %205 = vector.extract_strided_slice %194 {offsets = [0, 32], sizes = [2, 32], strides = [1, 1]} : vector<2x96xf32> to vector<2x32xf32>
    %206 = vector.extract_strided_slice %193 {offsets = [0, 32], sizes = [2, 32], strides = [1, 1]} : vector<2x96xf32> to vector<2x32xf32>
    %207 = arith.addf %205, %206 : vector<2x32xf32>
    %cst_65 = arith.constant 5.000000e-01 : f32
    %208 = vector.broadcast %cst_65 : f32 to vector<2x32xf32>
    %209 = arith.mulf %208, %207 : vector<2x32xf32>
    %210 = math.tanh %209 : vector<2x32xf32>
    %cst_66 = arith.constant 1.000000e+00 : f32
    %211 = vector.broadcast %cst_66 : f32 to vector<2x32xf32>
    %212 = arith.addf %210, %211 : vector<2x32xf32>
    %cst_67 = arith.constant 5.000000e-01 : f32
    %213 = vector.broadcast %cst_67 : f32 to vector<2x32xf32>
    %214 = arith.mulf %213, %212 : vector<2x32xf32>
    %215 = vector.extract_strided_slice %194 {offsets = [0, 64], sizes = [2, 32], strides = [1, 1]} : vector<2x96xf32> to vector<2x32xf32>
    %216 = vector.extract_strided_slice %193 {offsets = [0, 64], sizes = [2, 32], strides = [1, 1]} : vector<2x96xf32> to vector<2x32xf32>
    %217 = vector.broadcast %9 : vector<1x32xf32> to vector<2x32xf32>
    %218 = arith.addf %216, %217 : vector<2x32xf32>
    %219 = arith.mulf %204, %218 : vector<2x32xf32>
    %220 = arith.addf %215, %219 : vector<2x32xf32>
    %221 = math.tanh %220 : vector<2x32xf32>
    %cst_68 = arith.constant 1.000000e+00 : f32
    %222 = vector.broadcast %cst_68 : f32 to vector<2x32xf32>
    %223 = arith.subf %222, %214 : vector<2x32xf32>
    %224 = arith.mulf %223, %221 : vector<2x32xf32>
    %225 = arith.mulf %214, %192 : vector<2x32xf32>
    %226 = arith.addf %224, %225 : vector<2x32xf32>
    %cst_69 = arith.constant dense<0.000000e+00> : vector<2x96xf32>
    %227 = tpu.matmul %226, %3, %cst_69 {dimension_numbers = #tpu.dot_dimension_numbers<[1], [0], [0], [1], [0, 0, 1, 1], [], []>} : vector<2x32xf32>, vector<32x96xf32>, vector<2x96xf32> -> vector<2x96xf32>
    %228 = vector.extract_strided_slice %25 {offsets = [10, 0], sizes = [2, 96], strides = [1, 1]} : vector<16x96xf32> to vector<2x96xf32>
    %229 = vector.extract_strided_slice %228 {offsets = [0, 0], sizes = [2, 32], strides = [1, 1]} : vector<2x96xf32> to vector<2x32xf32>
    %230 = vector.extract_strided_slice %227 {offsets = [0, 0], sizes = [2, 32], strides = [1, 1]} : vector<2x96xf32> to vector<2x32xf32>
    %231 = arith.addf %229, %230 : vector<2x32xf32>
    %cst_70 = arith.constant 5.000000e-01 : f32
    %232 = vector.broadcast %cst_70 : f32 to vector<2x32xf32>
    %233 = arith.mulf %232, %231 : vector<2x32xf32>
    %234 = math.tanh %233 : vector<2x32xf32>
    %cst_71 = arith.constant 1.000000e+00 : f32
    %235 = vector.broadcast %cst_71 : f32 to vector<2x32xf32>
    %236 = arith.addf %234, %235 : vector<2x32xf32>
    %cst_72 = arith.constant 5.000000e-01 : f32
    %237 = vector.broadcast %cst_72 : f32 to vector<2x32xf32>
    %238 = arith.mulf %237, %236 : vector<2x32xf32>
    %239 = vector.extract_strided_slice %228 {offsets = [0, 32], sizes = [2, 32], strides = [1, 1]} : vector<2x96xf32> to vector<2x32xf32>
    %240 = vector.extract_strided_slice %227 {offsets = [0, 32], sizes = [2, 32], strides = [1, 1]} : vector<2x96xf32> to vector<2x32xf32>
    %241 = arith.addf %239, %240 : vector<2x32xf32>
    %cst_73 = arith.constant 5.000000e-01 : f32
    %242 = vector.broadcast %cst_73 : f32 to vector<2x32xf32>
    %243 = arith.mulf %242, %241 : vector<2x32xf32>
    %244 = math.tanh %243 : vector<2x32xf32>
    %cst_74 = arith.constant 1.000000e+00 : f32
    %245 = vector.broadcast %cst_74 : f32 to vector<2x32xf32>
    %246 = arith.addf %244, %245 : vector<2x32xf32>
    %cst_75 = arith.constant 5.000000e-01 : f32
    %247 = vector.broadcast %cst_75 : f32 to vector<2x32xf32>
    %248 = arith.mulf %247, %246 : vector<2x32xf32>
    %249 = vector.extract_strided_slice %228 {offsets = [0, 64], sizes = [2, 32], strides = [1, 1]} : vector<2x96xf32> to vector<2x32xf32>
    %250 = vector.extract_strided_slice %227 {offsets = [0, 64], sizes = [2, 32], strides = [1, 1]} : vector<2x96xf32> to vector<2x32xf32>
    %251 = vector.broadcast %9 : vector<1x32xf32> to vector<2x32xf32>
    %252 = arith.addf %250, %251 : vector<2x32xf32>
    %253 = arith.mulf %238, %252 : vector<2x32xf32>
    %254 = arith.addf %249, %253 : vector<2x32xf32>
    %255 = math.tanh %254 : vector<2x32xf32>
    %cst_76 = arith.constant 1.000000e+00 : f32
    %256 = vector.broadcast %cst_76 : f32 to vector<2x32xf32>
    %257 = arith.subf %256, %248 : vector<2x32xf32>
    %258 = arith.mulf %257, %255 : vector<2x32xf32>
    %259 = arith.mulf %248, %226 : vector<2x32xf32>
    %260 = arith.addf %258, %259 : vector<2x32xf32>
    %cst_77 = arith.constant dense<0.000000e+00> : vector<2x96xf32>
    %261 = tpu.matmul %260, %3, %cst_77 {dimension_numbers = #tpu.dot_dimension_numbers<[1], [0], [0], [1], [0, 0, 1, 1], [], []>} : vector<2x32xf32>, vector<32x96xf32>, vector<2x96xf32> -> vector<2x96xf32>
    %262 = vector.extract_strided_slice %25 {offsets = [12, 0], sizes = [2, 96], strides = [1, 1]} : vector<16x96xf32> to vector<2x96xf32>
    %263 = vector.extract_strided_slice %262 {offsets = [0, 0], sizes = [2, 32], strides = [1, 1]} : vector<2x96xf32> to vector<2x32xf32>
    %264 = vector.extract_strided_slice %261 {offsets = [0, 0], sizes = [2, 32], strides = [1, 1]} : vector<2x96xf32> to vector<2x32xf32>
    %265 = arith.addf %263, %264 : vector<2x32xf32>
    %cst_78 = arith.constant 5.000000e-01 : f32
    %266 = vector.broadcast %cst_78 : f32 to vector<2x32xf32>
    %267 = arith.mulf %266, %265 : vector<2x32xf32>
    %268 = math.tanh %267 : vector<2x32xf32>
    %cst_79 = arith.constant 1.000000e+00 : f32
    %269 = vector.broadcast %cst_79 : f32 to vector<2x32xf32>
    %270 = arith.addf %268, %269 : vector<2x32xf32>
    %cst_80 = arith.constant 5.000000e-01 : f32
    %271 = vector.broadcast %cst_80 : f32 to vector<2x32xf32>
    %272 = arith.mulf %271, %270 : vector<2x32xf32>
    %273 = vector.extract_strided_slice %262 {offsets = [0, 32], sizes = [2, 32], strides = [1, 1]} : vector<2x96xf32> to vector<2x32xf32>
    %274 = vector.extract_strided_slice %261 {offsets = [0, 32], sizes = [2, 32], strides = [1, 1]} : vector<2x96xf32> to vector<2x32xf32>
    %275 = arith.addf %273, %274 : vector<2x32xf32>
    %cst_81 = arith.constant 5.000000e-01 : f32
    %276 = vector.broadcast %cst_81 : f32 to vector<2x32xf32>
    %277 = arith.mulf %276, %275 : vector<2x32xf32>
    %278 = math.tanh %277 : vector<2x32xf32>
    %cst_82 = arith.constant 1.000000e+00 : f32
    %279 = vector.broadcast %cst_82 : f32 to vector<2x32xf32>
    %280 = arith.addf %278, %279 : vector<2x32xf32>
    %cst_83 = arith.constant 5.000000e-01 : f32
    %281 = vector.broadcast %cst_83 : f32 to vector<2x32xf32>
    %282 = arith.mulf %281, %280 : vector<2x32xf32>
    %283 = vector.extract_strided_slice %262 {offsets = [0, 64], sizes = [2, 32], strides = [1, 1]} : vector<2x96xf32> to vector<2x32xf32>
    %284 = vector.extract_strided_slice %261 {offsets = [0, 64], sizes = [2, 32], strides = [1, 1]} : vector<2x96xf32> to vector<2x32xf32>
    %285 = vector.broadcast %9 : vector<1x32xf32> to vector<2x32xf32>
    %286 = arith.addf %284, %285 : vector<2x32xf32>
    %287 = arith.mulf %272, %286 : vector<2x32xf32>
    %288 = arith.addf %283, %287 : vector<2x32xf32>
    %289 = math.tanh %288 : vector<2x32xf32>
    %cst_84 = arith.constant 1.000000e+00 : f32
    %290 = vector.broadcast %cst_84 : f32 to vector<2x32xf32>
    %291 = arith.subf %290, %282 : vector<2x32xf32>
    %292 = arith.mulf %291, %289 : vector<2x32xf32>
    %293 = arith.mulf %282, %260 : vector<2x32xf32>
    %294 = arith.addf %292, %293 : vector<2x32xf32>
    %cst_85 = arith.constant dense<0.000000e+00> : vector<2x96xf32>
    %295 = tpu.matmul %294, %3, %cst_85 {dimension_numbers = #tpu.dot_dimension_numbers<[1], [0], [0], [1], [0, 0, 1, 1], [], []>} : vector<2x32xf32>, vector<32x96xf32>, vector<2x96xf32> -> vector<2x96xf32>
    %296 = vector.extract_strided_slice %25 {offsets = [14, 0], sizes = [2, 96], strides = [1, 1]} : vector<16x96xf32> to vector<2x96xf32>
    %297 = vector.extract_strided_slice %296 {offsets = [0, 0], sizes = [2, 32], strides = [1, 1]} : vector<2x96xf32> to vector<2x32xf32>
    %298 = vector.extract_strided_slice %295 {offsets = [0, 0], sizes = [2, 32], strides = [1, 1]} : vector<2x96xf32> to vector<2x32xf32>
    %299 = arith.addf %297, %298 : vector<2x32xf32>
    %cst_86 = arith.constant 5.000000e-01 : f32
    %300 = vector.broadcast %cst_86 : f32 to vector<2x32xf32>
    %301 = arith.mulf %300, %299 : vector<2x32xf32>
    %302 = math.tanh %301 : vector<2x32xf32>
    %cst_87 = arith.constant 1.000000e+00 : f32
    %303 = vector.broadcast %cst_87 : f32 to vector<2x32xf32>
    %304 = arith.addf %302, %303 : vector<2x32xf32>
    %cst_88 = arith.constant 5.000000e-01 : f32
    %305 = vector.broadcast %cst_88 : f32 to vector<2x32xf32>
    %306 = arith.mulf %305, %304 : vector<2x32xf32>
    %307 = vector.extract_strided_slice %296 {offsets = [0, 32], sizes = [2, 32], strides = [1, 1]} : vector<2x96xf32> to vector<2x32xf32>
    %308 = vector.extract_strided_slice %295 {offsets = [0, 32], sizes = [2, 32], strides = [1, 1]} : vector<2x96xf32> to vector<2x32xf32>
    %309 = arith.addf %307, %308 : vector<2x32xf32>
    %cst_89 = arith.constant 5.000000e-01 : f32
    %310 = vector.broadcast %cst_89 : f32 to vector<2x32xf32>
    %311 = arith.mulf %310, %309 : vector<2x32xf32>
    %312 = math.tanh %311 : vector<2x32xf32>
    %cst_90 = arith.constant 1.000000e+00 : f32
    %313 = vector.broadcast %cst_90 : f32 to vector<2x32xf32>
    %314 = arith.addf %312, %313 : vector<2x32xf32>
    %cst_91 = arith.constant 5.000000e-01 : f32
    %315 = vector.broadcast %cst_91 : f32 to vector<2x32xf32>
    %316 = arith.mulf %315, %314 : vector<2x32xf32>
    %317 = vector.extract_strided_slice %296 {offsets = [0, 64], sizes = [2, 32], strides = [1, 1]} : vector<2x96xf32> to vector<2x32xf32>
    %318 = vector.extract_strided_slice %295 {offsets = [0, 64], sizes = [2, 32], strides = [1, 1]} : vector<2x96xf32> to vector<2x32xf32>
    %319 = vector.broadcast %9 : vector<1x32xf32> to vector<2x32xf32>
    %320 = arith.addf %318, %319 : vector<2x32xf32>
    %321 = arith.mulf %306, %320 : vector<2x32xf32>
    %322 = arith.addf %317, %321 : vector<2x32xf32>
    %323 = math.tanh %322 : vector<2x32xf32>
    %cst_92 = arith.constant 1.000000e+00 : f32
    %324 = vector.broadcast %cst_92 : f32 to vector<2x32xf32>
    %325 = arith.subf %324, %316 : vector<2x32xf32>
    %326 = arith.mulf %325, %323 : vector<2x32xf32>
    %327 = arith.mulf %316, %294 : vector<2x32xf32>
    %328 = arith.addf %326, %327 : vector<2x32xf32>
    %329 = tpu.concatenate %54, %90, %124, %158, %192, %226, %260, %294, %328 in 0 : vector<2x32xf32>, vector<2x32xf32>, vector<2x32xf32>, vector<2x32xf32>, vector<2x32xf32>, vector<2x32xf32>, vector<2x32xf32>, vector<2x32xf32>, vector<2x32xf32> -> vector<18x32xf32>
    %cst_93 = arith.constant dense<0.000000e+00> : vector<18x32xf32>
    %330 = tpu.matmul %329, %4, %cst_93 {dimension_numbers = #tpu.dot_dimension_numbers<[1], [0], [0], [1], [0, 0, 1, 1], [], []>} : vector<18x32xf32>, vector<32x32xf32>, vector<18x32xf32> -> vector<18x32xf32>
    %331 = vector.broadcast %10 : vector<1x32xf32> to vector<18x32xf32>
    %332 = arith.addf %330, %331 : vector<18x32xf32>
    %cst_94 = arith.constant 0.000000e+00 : f32
    %333 = vector.broadcast %cst_94 : f32 to vector<18x32xf32>
    %334 = arith.maximumf %332, %333 : vector<18x32xf32>
    %cst_95 = arith.constant dense<0.000000e+00> : vector<18x128xf32>
    %335 = tpu.matmul %334, %5, %cst_95 {dimension_numbers = #tpu.dot_dimension_numbers<[1], [0], [0], [1], [0, 0, 1, 1], [], []>} : vector<18x32xf32>, vector<32x128xf32>, vector<18x128xf32> -> vector<18x128xf32>
    %336 = vector.broadcast %11 : vector<1x128xf32> to vector<18x128xf32>
    %337 = arith.addf %335, %336 : vector<18x128xf32>
    %c0_96 = arith.constant 0 : index
    %c0_97 = arith.constant 0 : index
    %338 = vector.load %arg3[%c0_96, %c0_97] : memref<18x128xf32, #tpu.memory_space<vmem>>, vector<18x128xf32>
    tpu.vector_store %arg3[%c0_96, %c0_97], %337 {strides = array<i32>} : memref<18x128xf32, #tpu.memory_space<vmem>>, vector<18x128xf32>,
    %339 = tpu.concatenate %55, %90, %124, %158, %192, %226, %260, %294, %328 in 0 : vector<2x32xf32>, vector<2x32xf32>, vector<2x32xf32>, vector<2x32xf32>, vector<2x32xf32>, vector<2x32xf32>, vector<2x32xf32>, vector<2x32xf32>, vector<2x32xf32> -> vector<18x32xf32>
    %c0_98 = arith.constant 0 : index
    %c0_99 = arith.constant 0 : index
    %340 = vector.load %arg4[%c0_98, %c0_99] : memref<18x32xf32, #tpu.memory_space<vmem>>, vector<18x32xf32>
    tpu.vector_store %arg4[%c0_98, %c0_99], %339 {strides = array<i32>} : memref<18x32xf32, #tpu.memory_space<vmem>>, vector<18x32xf32>,
    return
  }
  func.func @transform_0(%arg0: i32) -> (i32, i32) {
    %c0_i32 = arith.constant 0 : i32
    %c0_i32_0 = arith.constant 0 : i32
    %c0_i32_1 = arith.constant 0 : i32
    return %c0_i32, %c0_i32_0 : i32, i32
  }
  func.func @transform_1(%arg0: i32) -> (i32, i32) {
    %c0_i32 = arith.constant 0 : i32
    %c0_i32_0 = arith.constant 0 : i32
    %c0_i32_1 = arith.constant 0 : i32
    return %c0_i32, %c0_i32_0 : i32, i32
  }
  func.func @transform_2(%arg0: i32) -> (i32, i32) {
    %c0_i32 = arith.constant 0 : i32
    %c0_i32_0 = arith.constant 0 : i32
    %c0_i32_1 = arith.constant 0 : i32
    return %c0_i32, %c0_i32_0 : i32, i32
  }
  func.func @transform_3(%arg0: i32) -> (i32, i32) {
    %c0_i32 = arith.constant 0 : i32
    %c0_i32_0 = arith.constant 0 : i32
    %c0_i32_1 = arith.constant 0 : i32
    return %c0_i32, %c0_i32_0 : i32, i32
  }
}

</mosaic_0001>

<llo_original>
// kernel: rnn_encoder_forward.1
$region0: #{rnn_encoder_forward.1}
  #allocation0 [shape = 'u32[]', space=smem, size = 0x4, offset = 0x4, fixed_abs, tag = 'smem constant byte address 0x4 - core index']
  #allocation1 [shape = 'u32[144,128]{1,0:T(1,128)}', space=vmem, size = 0x12000, scoped, tag = 'internal scratch']
  %s0 = inlined_call_operand.vmem [shape: f32[16,32], index: 0, kind: input, shape index: {}]
  %s1 = inlined_call_operand.vmem [shape: f32[200,128], index: 1, kind: input, shape index: {}]
  %s2 = inlined_call_operand.vmem [shape: f32[18,128], index: 2, kind: output, shape index: {0}]
  %s3 = inlined_call_operand.vmem [shape: f32[18,32], index: 3, kind: output, shape index: {1}]
  %4 = xla_tuple %s2, %s3
  %s5 = sld [smem:[#allocation0]]
  $region26: #{rnn_encoder_forward.1} parent=0
    _
  %s7 = ssub.s32 1, %s5
  %s8 = scalar_select 0, %s7, %s5
  // Predicated region
  $region2: #{rnn_encoder_forward.1} parent=0 // pred_check
    _
  $region3: #{rnn_encoder_forward.1} parent=0 // pred_check_branch
    %10 = sbr.rel (0) target = $region5
  $region4: #{rnn_encoder_forward.1} parent=0 // pred_region
    _
  $region5: #{rnn_encoder_forward.1} parent=0 // pred_fallthru
    _
  // Predicated region
  $region6: #{rnn_encoder_forward.1} parent=0 // pred_check
    _
  $region7: #{rnn_encoder_forward.1} parent=0 // pred_check_branch
    %12 = sbr.rel (0) target = $region9
  $region8: #{rnn_encoder_forward.1} parent=0 // pred_region
    _
  $region9: #{rnn_encoder_forward.1} parent=0 // pred_fallthru
    _
  %v13 = vld [vmem:[%s1] sm:$0xff]
  %v14 = vld [vmem:[%s1 + $0x8] sm:$0xff]
  %v15 = vld [vmem:[%s1 + $0x10] sm:$0xff]
  %v16 = vld [vmem:[%s1 + $0x18] sm:$0xff]
  %v17 = vld [vmem:[%s1 + $0x20] sm:$0xff]
  %v18 = vld [vmem:[%s1 + $0x28] sm:$0xff]
  %v19 = vld [vmem:[%s1 + $0x30] sm:$0xff]
  %v20 = vld [vmem:[%s1 + $0x38] sm:$0xff]
  %v21 = vld [vmem:[%s1 + $0x40] sm:$0xff]
  %v22 = vld [vmem:[%s1 + $0x48] sm:$0xff]
  %v23 = vld [vmem:[%s1 + $0x50] sm:$0xff]
  %v24 = vld [vmem:[%s1 + $0x58] sm:$0xff]
  %v25 = vld [vmem:[%s1 + $0x60] sm:$0xff]
  %v26 = vld [vmem:[%s1 + $0x68] sm:$0xff]
  %v27 = vld [vmem:[%s1 + $0x70] sm:$0xff]
  %v28 = vld [vmem:[%s1 + $0x78] sm:$0xff]
  %v29 = vld [vmem:[%s1 + $0x80] sm:$0xff]
  %v30 = vld [vmem:[%s1 + $0x88] sm:$0xff]
  %v31 = vld [vmem:[%s1 + $0x90] sm:$0xff]
  %v32 = vld [vmem:[%s1 + $0x98] sm:$0xff]
  %v33 = vld [vmem:[%s1 + $0xa0] sm:$0xff]
  %v34 = vld [vmem:[%s1 + $0xa8] sm:$0xff]
  %v35 = vld [vmem:[%s1 + $0xb0] sm:$0xff]
  %v36 = vld [vmem:[%s1 + $0xb8] sm:$0xff]
  %v37 = vld [vmem:[%s1 + $0xc0] sm:$0x1]
  %v38 = vld [vmem:[%s1 + $0xc1] sm:$0x1]
  %v39 = vld [vmem:[%s1 + $0xc2] sm:$0x1]
  %v40 = vld [vmem:[%s1 + $0xc3] sm:$0x1]
  %v41 = vld [vmem:[%s1 + $0xc4] sm:$0x1]
  %v42 = vld [vmem:[%s1 + $0xc5] sm:$0x1]
  %v43 = vld [vmem:[%s0] sm:$0xff]
  %v44 = vld [vmem:[%s0 + $0x8] sm:$0xff]
  %v45 = vlaneseq
  %v46 = vshrl.u32 %v45, 7
  %v47 = vsub.s32 0, %v46
  %v48 = vrot.slane %v37, %v47
  %vm49 = vcmask 261120
  %v51 = vsel %vm49, %v43, 0
  %v54 = vsel %vm49, %v44, 0
  %56 = vmatprep.subr.mxu0 0.0
  %57 = vmatpush1.msra.mxu0 %v13
  %58 = vmatprep.subr.mxu0 0.0
  %59 = vmatpush1.msra.mxu0 %v14
  %60 = vmatprep.subr.mxu0 0.0
  %61 = vmatpush1.msra.mxu0 %v15
  %62 = vmatprep.subr.mxu0 0.0
  %63 = vmatpush1.msra.mxu0 %v16
  %64 = vmatprep.subr.mxu0 0.0
  %65 = vmatpush1.msra.mxu0 0.0
  %66 = vmatprep.subr.mxu0 0.0
  %67 = vmatpush1.msra.mxu0 0.0
  %68 = vmatprep.subr.mxu0 0.0
  %69 = vmatpush1.msra.mxu0 0.0
  %70 = vmatprep.subr.mxu0 0.0
  %71 = vmatpush1.msra.mxu0 0.0
  %72 = vmatprep.subr.mxu0 0.0
  %73 = vmatpush1.msra.mxu0 0.0
  %74 = vmatprep.subr.mxu0 0.0
  %75 = vmatpush1.msra.mxu0 0.0
  %76 = vmatprep.subr.mxu0 0.0
  %77 = vmatpush1.msra.mxu0 0.0
  %78 = vmatprep.subr.mxu0 0.0
  %79 = vmatpush1.msra.mxu0 0.0
  %80 = vmatprep.subr.mxu0 0.0
  %81 = vmatpush1.msra.mxu0 0.0
  %82 = vmatprep.subr.mxu0 0.0
  %83 = vmatpush1.msra.mxu0 0.0
  %84 = vmatprep.subr.mxu0 0.0
  %85 = vmatpush1.msra.mxu0 0.0
  %86 = vmatprep.subr.mxu0 0.0
  %87 = vmatpush1.msra.mxu0 0.0
  %88 = vmatprep.subr.mxu0 0.0
  %89 = vmatpush1.msra.mxu0 0.0
  %90 = vmatprep.subr.mxu0 0.0
  %91 = vmatpush1.msra.mxu0 0.0
  %92 = vmatprep.subr.mxu0 0.0
  %93 = vmatpush1.msra.mxu0 0.0
  %94 = vmatprep.subr.mxu0 0.0
  %95 = vmatpush1.msra.mxu0 0.0
  %96 = vmatprep.subr.mxu0 0.0
  %97 = vmatpush1.msra.mxu0 0.0
  %98 = vmatprep.subr.mxu0 0.0
  %99 = vmatpush1.msra.mxu0 0.0
  %100 = vmatprep.subr.mxu0 0.0
  %101 = vmatpush1.msra.mxu0 0.0
  %102 = vmatprep.subr.mxu0 0.0
  %103 = vmatpush1.msra.mxu0 0.0
  %104 = vmatprep.subr.mxu0 0.0
  %105 = vmatpush1.msra.mxu0 0.0
  %106 = vmatprep.subr.mxu0 0.0
  %107 = vmatpush1.msra.mxu0 0.0
  %108 = vmatprep.subr.mxu0 0.0
  %109 = vmatpush1.msra.mxu0 0.0
  %110 = vmatprep.subr.mxu0 0.0
  %111 = vmatpush1.msra.mxu0 0.0
  %112 = vmatprep.subr.mxu0 0.0
  %113 = vmatpush1.msra.mxu0 0.0
  %114 = vmatprep.subr.mxu0 0.0
  %115 = vmatpush1.msra.mxu0 0.0
  %116 = vmatprep.subr.mxu0 0.0
  %117 = vmatpush1.msra.mxu0 0.0
  %118 = vmatprep.subr.mxu0 0.0
  %119 = vmatpush1.msra.mxu0 0.0
  %120 = vmatprep.mubr.f32.mxu0 0.0
  %121 = vmatmul.mubr.f32.gmra.mrb[0].mxu0 %v51
  %v122 = vpop.f32.mrb[0].mxu0
  %v123 = vadd.f32 %v48, %v122
  %v124 = vpop.f32.mrb[0].mxu0
  %125 = vmatprep.mubr.f32.mxu0 0.0
  %126 = vmatmul.mubr.f32.gmra.mrb[0].mxu0 %v54
  %v127 = vpop.f32.mrb[0].mxu0
  %v128 = vadd.f32 %v48, %v127
  %v129 = vpop.f32.mrb[0].mxu0
  %130 = vdwg.mxu0
  %v131 = vmax.f32 %v123, 0.0
  %v132 = vmax.f32 %v128, 0.0
  %v133 = vlaneseq
  %v134 = vshrl.u32 %v133, 7
  %v135 = vsub.s32 0, %v134
  %v136 = vrot.slane %v38, %v135
  %v138 = vsel %vm49, %v131, 0
  %v141 = vsel %vm49, %v132, 0
  %143 = vmatprep.subr.mxu0 0.0
  %144 = vmatpush1.msra.mxu0 %v17
  %145 = vmatprep.subr.mxu0 0.0
  %146 = vmatpush1.msra.mxu0 %v18
  %147 = vmatprep.subr.mxu0 0.0
  %148 = vmatpush1.msra.mxu0 %v19
  %149 = vmatprep.subr.mxu0 0.0
  %150 = vmatpush1.msra.mxu0 %v20
  %151 = vmatprep.subr.mxu0 0.0
  %152 = vmatpush1.msra.mxu0 0.0
  %153 = vmatprep.subr.mxu0 0.0
  %154 = vmatpush1.msra.mxu0 0.0
  %155 = vmatprep.subr.mxu0 0.0
  %156 = vmatpush1.msra.mxu0 0.0
  %157 = vmatprep.subr.mxu0 0.0
  %158 = vmatpush1.msra.mxu0 0.0
  %159 = vmatprep.subr.mxu0 0.0
  %160 = vmatpush1.msra.mxu0 0.0
  %161 = vmatprep.subr.mxu0 0.0
  %162 = vmatpush1.msra.mxu0 0.0
  %163 = vmatprep.subr.mxu0 0.0
  %164 = vmatpush1.msra.mxu0 0.0
  %165 = vmatprep.subr.mxu0 0.0
  %166 = vmatpush1.msra.mxu0 0.0
  %167 = vmatprep.subr.mxu0 0.0
  %168 = vmatpush1.msra.mxu0 0.0
  %169 = vmatprep.subr.mxu0 0.0
  %170 = vmatpush1.msra.mxu0 0.0
  %171 = vmatprep.subr.mxu0 0.0
  %172 = vmatpush1.msra.mxu0 0.0
  %173 = vmatprep.subr.mxu0 0.0
  %174 = vmatpush1.msra.mxu0 0.0
  %175 = vmatprep.subr.mxu0 0.0
  %176 = vmatpush1.msra.mxu0 0.0
  %177 = vmatprep.subr.mxu0 0.0
  %178 = vmatpush1.msra.mxu0 0.0
  %179 = vmatprep.subr.mxu0 0.0
  %180 = vmatpush1.msra.mxu0 0.0
  %181 = vmatprep.subr.mxu0 0.0
  %182 = vmatpush1.msra.mxu0 0.0
  %183 = vmatprep.subr.mxu0 0.0
  %184 = vmatpush1.msra.mxu0 0.0
  %185 = vmatprep.subr.mxu0 0.0
  %186 = vmatpush1.msra.mxu0 0.0
  %187 = vmatprep.subr.mxu0 0.0
  %188 = vmatpush1.msra.mxu0 0.0
  %189 = vmatprep.subr.mxu0 0.0
  %190 = vmatpush1.msra.mxu0 0.0
  %191 = vmatprep.subr.mxu0 0.0
  %192 = vmatpush1.msra.mxu0 0.0
  %193 = vmatprep.subr.mxu0 0.0
  %194 = vmatpush1.msra.mxu0 0.0
  %195 = vmatprep.subr.mxu0 0.0
  %196 = vmatpush1.msra.mxu0 0.0
  %197 = vmatprep.subr.mxu0 0.0
  %198 = vmatpush1.msra.mxu0 0.0
  %199 = vmatprep.subr.mxu0 0.0
  %200 = vmatpush1.msra.mxu0 0.0
  %201 = vmatprep.subr.mxu0 0.0
  %202 = vmatpush1.msra.mxu0 0.0
  %203 = vmatprep.subr.mxu0 0.0
  %204 = vmatpush1.msra.mxu0 0.0
  %205 = vmatprep.subr.mxu0 0.0
  %206 = vmatpush1.msra.mxu0 0.0
  %207 = vmatprep.mubr.f32.mxu0 0.0
  %208 = vmatmul.mubr.f32.gmra.mrb[0].mxu0 %v138
  %v209 = vpop.f32.mrb[0].mxu0
  %v210 = vadd.f32 %v136, %v209
  %v211 = vpop.f32.mrb[0].mxu0
  %212 = vmatprep.mubr.f32.mxu0 0.0
  %213 = vmatmul.mubr.f32.gmra.mrb[0].mxu0 %v141
  %v214 = vpop.f32.mrb[0].mxu0
  %v215 = vadd.f32 %v136, %v214
  %v216 = vpop.f32.mrb[0].mxu0
  %217 = vdwg.mxu0
  %v218 = vmax.f32 %v210, 0.0
  %v219 = vmax.f32 %v215, 0.0
  %v220 = vlaneseq
  %v221 = vshrl.u32 %v220, 7
  %v222 = vsub.s32 0, %v221
  %v223 = vrot.slane %v39, %v222
  %v225 = vsel %vm49, %v218, 0
  %v228 = vsel %vm49, %v219, 0
  %230 = vmatprep.subr.mxu0 0.0
  %231 = vmatpush1.msra.mxu0 %v21
  %232 = vmatprep.subr.mxu0 0.0
  %233 = vmatpush1.msra.mxu0 %v22
  %234 = vmatprep.subr.mxu0 0.0
  %235 = vmatpush1.msra.mxu0 %v23
  %236 = vmatprep.subr.mxu0 0.0
  %237 = vmatpush1.msra.mxu0 %v24
  %238 = vmatprep.subr.mxu0 0.0
  %239 = vmatpush1.msra.mxu0 0.0
  %240 = vmatprep.subr.mxu0 0.0
  %241 = vmatpush1.msra.mxu0 0.0
  %242 = vmatprep.subr.mxu0 0.0
  %243 = vmatpush1.msra.mxu0 0.0
  %244 = vmatprep.subr.mxu0 0.0
  %245 = vmatpush1.msra.mxu0 0.0
  %246 = vmatprep.subr.mxu0 0.0
  %247 = vmatpush1.msra.mxu0 0.0
  %248 = vmatprep.subr.mxu0 0.0
  %249 = vmatpush1.msra.mxu0 0.0
  %250 = vmatprep.subr.mxu0 0.0
  %251 = vmatpush1.msra.mxu0 0.0
  %252 = vmatprep.subr.mxu0 0.0
  %253 = vmatpush1.msra.mxu0 0.0
  %254 = vmatprep.subr.mxu0 0.0
  %255 = vmatpush1.msra.mxu0 0.0
  %256 = vmatprep.subr.mxu0 0.0
  %257 = vmatpush1.msra.mxu0 0.0
  %258 = vmatprep.subr.mxu0 0.0
  %259 = vmatpush1.msra.mxu0 0.0
  %260 = vmatprep.subr.mxu0 0.0
  %261 = vmatpush1.msra.mxu0 0.0
  %262 = vmatprep.subr.mxu0 0.0
  %263 = vmatpush1.msra.mxu0 0.0
  %264 = vmatprep.subr.mxu0 0.0
  %265 = vmatpush1.msra.mxu0 0.0
  %266 = vmatprep.subr.mxu0 0.0
  %267 = vmatpush1.msra.mxu0 0.0
  %268 = vmatprep.subr.mxu0 0.0
  %269 = vmatpush1.msra.mxu0 0.0
  %270 = vmatprep.subr.mxu0 0.0
  %271 = vmatpush1.msra.mxu0 0.0
  %272 = vmatprep.subr.mxu0 0.0
  %273 = vmatpush1.msra.mxu0 0.0
  %274 = vmatprep.subr.mxu0 0.0
  %275 = vmatpush1.msra.mxu0 0.0
  %276 = vmatprep.subr.mxu0 0.0
  %277 = vmatpush1.msra.mxu0 0.0
  %278 = vmatprep.subr.mxu0 0.0
  %279 = vmatpush1.msra.mxu0 0.0
  %280 = vmatprep.subr.mxu0 0.0
  %281 = vmatpush1.msra.mxu0 0.0
  %282 = vmatprep.subr.mxu0 0.0
  %283 = vmatpush1.msra.mxu0 0.0
  %284 = vmatprep.subr.mxu0 0.0
  %285 = vmatpush1.msra.mxu0 0.0
  %286 = vmatprep.subr.mxu0 0.0
  %287 = vmatpush1.msra.mxu0 0.0
  %288 = vmatprep.subr.mxu0 0.0
  %289 = vmatpush1.msra.mxu0 0.0
  %290 = vmatprep.subr.mxu0 0.0
  %291 = vmatpush1.msra.mxu0 0.0
  %292 = vmatprep.subr.mxu0 0.0
  %293 = vmatpush1.msra.mxu0 0.0
  %294 = vmatprep.mubr.f32.mxu0 0.0
  %295 = vmatmul.mubr.f32.gmra.mrb[0].mxu0 %v225
  %v296 = vpop.f32.mrb[0].mxu0
  %v297 = vadd.f32 %v223, %v296
  %v298 = vpop.f32.mrb[0].mxu0
  %299 = vmatprep.mubr.f32.mxu0 0.0
  %300 = vmatmul.mubr.f32.gmra.mrb[0].mxu0 %v228
  %v301 = vpop.f32.mrb[0].mxu0
  %v302 = vadd.f32 %v223, %v301
  %v303 = vpop.f32.mrb[0].mxu0
  %304 = vdwg.mxu0
  %v305 = vmax.f32 %v38, 0.0
  %v307 = vsel %vm49, %v305, 0
  %309 = vmatprep.subr.mxu0 0.0
  %310 = vmatpush1.msra.mxu0 %v21
  %311 = vmatprep.subr.mxu0 0.0
  %312 = vmatpush1.msra.mxu0 %v22
  %313 = vmatprep.subr.mxu0 0.0
  %314 = vmatpush1.msra.mxu0 %v23
  %315 = vmatprep.subr.mxu0 0.0
  %316 = vmatpush1.msra.mxu0 %v24
  %317 = vmatprep.subr.mxu0 0.0
  %318 = vmatpush1.msra.mxu0 0.0
  %319 = vmatprep.subr.mxu0 0.0
  %320 = vmatpush1.msra.mxu0 0.0
  %321 = vmatprep.subr.mxu0 0.0
  %322 = vmatpush1.msra.mxu0 0.0
  %323 = vmatprep.subr.mxu0 0.0
  %324 = vmatpush1.msra.mxu0 0.0
  %325 = vmatprep.subr.mxu0 0.0
  %326 = vmatpush1.msra.mxu0 0.0
  %327 = vmatprep.subr.mxu0 0.0
  %328 = vmatpush1.msra.mxu0 0.0
  %329 = vmatprep.subr.mxu0 0.0
  %330 = vmatpush1.msra.mxu0 0.0
  %331 = vmatprep.subr.mxu0 0.0
  %332 = vmatpush1.msra.mxu0 0.0
  %333 = vmatprep.subr.mxu0 0.0
  %334 = vmatpush1.msra.mxu0 0.0
  %335 = vmatprep.subr.mxu0 0.0
  %336 = vmatpush1.msra.mxu0 0.0
  %337 = vmatprep.subr.mxu0 0.0
  %338 = vmatpush1.msra.mxu0 0.0
  %339 = vmatprep.subr.mxu0 0.0
  %340 = vmatpush1.msra.mxu0 0.0
  %341 = vmatprep.subr.mxu0 0.0
  %342 = vmatpush1.msra.mxu0 0.0
  %343 = vmatprep.subr.mxu0 0.0
  %344 = vmatpush1.msra.mxu0 0.0
  %345 = vmatprep.subr.mxu0 0.0
  %346 = vmatpush1.msra.mxu0 0.0
  %347 = vmatprep.subr.mxu0 0.0
  %348 = vmatpush1.msra.mxu0 0.0
  %349 = vmatprep.subr.mxu0 0.0
  %350 = vmatpush1.msra.mxu0 0.0
  %351 = vmatprep.subr.mxu0 0.0
  %352 = vmatpush1.msra.mxu0 0.0
  %353 = vmatprep.subr.mxu0 0.0
  %354 = vmatpush1.msra.mxu0 0.0
  %355 = vmatprep.subr.mxu0 0.0
  %356 = vmatpush1.msra.mxu0 0.0
  %357 = vmatprep.subr.mxu0 0.0
  %358 = vmatpush1.msra.mxu0 0.0
  %359 = vmatprep.subr.mxu0 0.0
  %360 = vmatpush1.msra.mxu0 0.0
  %361 = vmatprep.subr.mxu0 0.0
  %362 = vmatpush1.msra.mxu0 0.0
  %363 = vmatprep.subr.mxu0 0.0
  %364 = vmatpush1.msra.mxu0 0.0
  %365 = vmatprep.subr.mxu0 0.0
  %366 = vmatpush1.msra.mxu0 0.0
  %367 = vmatprep.subr.mxu0 0.0
  %368 = vmatpush1.msra.mxu0 0.0
  %369 = vmatprep.subr.mxu0 0.0
  %370 = vmatpush1.msra.mxu0 0.0
  %371 = vmatprep.subr.mxu0 0.0
  %372 = vmatpush1.msra.mxu0 0.0
  %373 = vmatprep.mubr.f32.mxu0 0.0
  %374 = vmatmul.mubr.f32.gmra.mrb[0].mxu0 %v307
  %v375 = vpop.f32.mrb[0].mxu0
  %v376 = vadd.f32 %v39, %v375
  %v377 = vpop.f32.mrb[0].mxu0
  %378 = vdwg.mxu0
  %v379 = vmul.f32 %v376, 0.5
  %v380 = vtanh.pop %v379
  %v381 = vadd.f32 %v380, 1.0
  %v382 = vmul.f32 %v381, 0.5
  %v383 = vmul.f32 %v382, %v40
  %385 = vrot.lane.b32.xlu0 %v383, 64
  %v386 = vpop.permute.xlu0 %385
  %v388 = vadd.f32 %v376, %v386
  %v389 = vtanh.pop %v388
  %v390 = vsub.f32 1.0, %v382
  %392 = vrot.lane.b32.xlu0 %v389, 96
  %v393 = vpop.permute.xlu0 %392
  %v395 = vmul.f32 %v390, %v393
  %v396 = vlaneseq
  %v397 = vshrl.u32 %v396, 7
  %v398 = vsub.s32 0, %v397
  %v399 = vrot.slane %v395, %v398
  %v401 = vsel %vm49, 0.0, 0
  %403 = vmatprep.subr.mxu0 0.0
  %404 = vmatpush1.msra.mxu0 %v25
  %405 = vmatprep.subr.mxu0 0.0
  %406 = vmatpush1.msra.mxu0 %v26
  %407 = vmatprep.subr.mxu0 0.0
  %408 = vmatpush1.msra.mxu0 %v27
  %409 = vmatprep.subr.mxu0 0.0
  %410 = vmatpush1.msra.mxu0 %v28
  %411 = vmatprep.subr.mxu0 0.0
  %412 = vmatpush1.msra.mxu0 0.0
  %413 = vmatprep.subr.mxu0 0.0
  %414 = vmatpush1.msra.mxu0 0.0
  %415 = vmatprep.subr.mxu0 0.0
  %416 = vmatpush1.msra.mxu0 0.0
  %417 = vmatprep.subr.mxu0 0.0
  %418 = vmatpush1.msra.mxu0 0.0
  %419 = vmatprep.subr.mxu0 0.0
  %420 = vmatpush1.msra.mxu0 0.0
  %421 = vmatprep.subr.mxu0 0.0
  %422 = vmatpush1.msra.mxu0 0.0
  %423 = vmatprep.subr.mxu0 0.0
  %424 = vmatpush1.msra.mxu0 0.0
  %425 = vmatprep.subr.mxu0 0.0
  %426 = vmatpush1.msra.mxu0 0.0
  %427 = vmatprep.subr.mxu0 0.0
  %428 = vmatpush1.msra.mxu0 0.0
  %429 = vmatprep.subr.mxu0 0.0
  %430 = vmatpush1.msra.mxu0 0.0
  %431 = vmatprep.subr.mxu0 0.0
  %432 = vmatpush1.msra.mxu0 0.0
  %433 = vmatprep.subr.mxu0 0.0
  %434 = vmatpush1.msra.mxu0 0.0
  %435 = vmatprep.subr.mxu0 0.0
  %436 = vmatpush1.msra.mxu0 0.0
  %437 = vmatprep.subr.mxu0 0.0
  %438 = vmatpush1.msra.mxu0 0.0
  %439 = vmatprep.subr.mxu0 0.0
  %440 = vmatpush1.msra.mxu0 0.0
  %441 = vmatprep.subr.mxu0 0.0
  %442 = vmatpush1.msra.mxu0 0.0
  %443 = vmatprep.subr.mxu0 0.0
  %444 = vmatpush1.msra.mxu0 0.0
  %445 = vmatprep.subr.mxu0 0.0
  %446 = vmatpush1.msra.mxu0 0.0
  %447 = vmatprep.subr.mxu0 0.0
  %448 = vmatpush1.msra.mxu0 0.0
  %449 = vmatprep.subr.mxu0 0.0
  %450 = vmatpush1.msra.mxu0 0.0
  %451 = vmatprep.subr.mxu0 0.0
  %452 = vmatpush1.msra.mxu0 0.0
  %453 = vmatprep.subr.mxu0 0.0
  %454 = vmatpush1.msra.mxu0 0.0
  %455 = vmatprep.subr.mxu0 0.0
  %456 = vmatpush1.msra.mxu0 0.0
  %457 = vmatprep.subr.mxu0 0.0
  %458 = vmatpush1.msra.mxu0 0.0
  %459 = vmatprep.subr.mxu0 0.0
  %460 = vmatpush1.msra.mxu0 0.0
  %461 = vmatprep.subr.mxu0 0.0
  %462 = vmatpush1.msra.mxu0 0.0
  %463 = vmatprep.subr.mxu0 0.0
  %464 = vmatpush1.msra.mxu0 0.0
  %465 = vmatprep.subr.mxu0 0.0
  %466 = vmatpush1.msra.mxu0 0.0
  %467 = vmatprep.mubr.f32.mxu0 0.0
  %468 = vmatmul.mubr.f32.gmra.mrb[0].mxu0 %v401
  %v469 = vpop.f32.mrb[0].mxu0
  %v470 = vadd.f32 0.0, %v469
  %v471 = vpop.f32.mrb[0].mxu0
  %472 = vdwg.mxu0
  %v473 = vadd.f32 %v297, %v470
  %v474 = vmul.f32 %v473, 0.5
  %v475 = vtanh.pop %v474
  %v476 = vadd.f32 %v475, 1.0
  %v477 = vmul.f32 %v476, 0.5
  %v478 = vlaneseq
  %v479 = vshrl.u32 %v478, 7
  %v480 = vsub.s32 0, %v479
  %v481 = vrot.slane %v40, %v480
  %483 = vrot.lane.b32.xlu0 %v481, 64
  %v484 = vpop.permute.xlu0 %483
  %v486 = vadd.f32 %v470, %v484
  %488 = vrot.lane.b32.xlu0 %v486, 64
  %v489 = vpop.permute.xlu0 %488
  %v491 = vmul.f32 %v477, %v489
  %493 = vrot.lane.b32.xlu0 %v491, 64
  %v494 = vpop.permute.xlu0 %493
  %v496 = vadd.f32 %v297, %v494
  %v497 = vtanh.pop %v496
  %v498 = vsub.f32 1.0, %v477
  %500 = vrot.lane.b32.xlu0 %v497, 96
  %v501 = vpop.permute.xlu0 %500
  %v503 = vmul.f32 %v498, %v501
  %v504 = vmul.f32 %v477, 0.0
  %v505 = vadd.f32 %v503, %v504
  %507 = vrot.lane.b32.xlu0 %v505, 96
  %v508 = vpop.permute.xlu0 %507
  %v509 = vsel %vm49, %v508, 0
  %511 = vmatprep.subr.mxu0 0.0
  %512 = vmatpush1.msra.mxu0 %v25
  %513 = vmatprep.subr.mxu0 0.0
  %514 = vmatpush1.msra.mxu0 %v26
  %515 = vmatprep.subr.mxu0 0.0
  %516 = vmatpush1.msra.mxu0 %v27
  %517 = vmatprep.subr.mxu0 0.0
  %518 = vmatpush1.msra.mxu0 %v28
  %519 = vmatprep.subr.mxu0 0.0
  %520 = vmatpush1.msra.mxu0 0.0
  %521 = vmatprep.subr.mxu0 0.0
  %522 = vmatpush1.msra.mxu0 0.0
  %523 = vmatprep.subr.mxu0 0.0
  %524 = vmatpush1.msra.mxu0 0.0
  %525 = vmatprep.subr.mxu0 0.0
  %526 = vmatpush1.msra.mxu0 0.0
  %527 = vmatprep.subr.mxu0 0.0
  %528 = vmatpush1.msra.mxu0 0.0
  %529 = vmatprep.subr.mxu0 0.0
  %530 = vmatpush1.msra.mxu0 0.0
  %531 = vmatprep.subr.mxu0 0.0
  %532 = vmatpush1.msra.mxu0 0.0
  %533 = vmatprep.subr.mxu0 0.0
  %534 = vmatpush1.msra.mxu0 0.0
  %535 = vmatprep.subr.mxu0 0.0
  %536 = vmatpush1.msra.mxu0 0.0
  %537 = vmatprep.subr.mxu0 0.0
  %538 = vmatpush1.msra.mxu0 0.0
  %539 = vmatprep.subr.mxu0 0.0
  %540 = vmatpush1.msra.mxu0 0.0
  %541 = vmatprep.subr.mxu0 0.0
  %542 = vmatpush1.msra.mxu0 0.0
  %543 = vmatprep.subr.mxu0 0.0
  %544 = vmatpush1.msra.mxu0 0.0
  %545 = vmatprep.subr.mxu0 0.0
  %546 = vmatpush1.msra.mxu0 0.0
  %547 = vmatprep.subr.mxu0 0.0
  %548 = vmatpush1.msra.mxu0 0.0
  %549 = vmatprep.subr.mxu0 0.0
  %550 = vmatpush1.msra.mxu0 0.0
  %551 = vmatprep.subr.mxu0 0.0
  %552 = vmatpush1.msra.mxu0 0.0
  %553 = vmatprep.subr.mxu0 0.0
  %554 = vmatpush1.msra.mxu0 0.0
  %555 = vmatprep.subr.mxu0 0.0
  %556 = vmatpush1.msra.mxu0 0.0
  %557 = vmatprep.subr.mxu0 0.0
  %558 = vmatpush1.msra.mxu0 0.0
  %559 = vmatprep.subr.mxu0 0.0
  %560 = vmatpush1.msra.mxu0 0.0
  %561 = vmatprep.subr.mxu0 0.0
  %562 = vmatpush1.msra.mxu0 0.0
  %563 = vmatprep.subr.mxu0 0.0
  %564 = vmatpush1.msra.mxu0 0.0
  %565 = vmatprep.subr.mxu0 0.0
  %566 = vmatpush1.msra.mxu0 0.0
  %567 = vmatprep.subr.mxu0 0.0
  %568 = vmatpush1.msra.mxu0 0.0
  %569 = vmatprep.subr.mxu0 0.0
  %570 = vmatpush1.msra.mxu0 0.0
  %571 = vmatprep.subr.mxu0 0.0
  %572 = vmatpush1.msra.mxu0 0.0
  %573 = vmatprep.subr.mxu0 0.0
  %574 = vmatpush1.msra.mxu0 0.0
  %575 = vmatprep.mubr.f32.mxu0 0.0
  %576 = vmatmul.mubr.f32.gmra.mrb[0].mxu0 %v509
  %v577 = vpop.f32.mrb[0].mxu0
  %v578 = vadd.f32 0.0, %v577
  %v579 = vpop.f32.mrb[0].mxu0
  %580 = vdwg.mxu0
  %v582 = vrot.slane %v578, 6
  %v584 = vadd.f32 %v297, %v582
  %v585 = vmul.f32 %v584, 0.5
  %v586 = vtanh.pop %v585
  %v587 = vadd.f32 %v586, 1.0
  %v588 = vmul.f32 %v587, 0.5
  %v589 = vadd.f32 %v578, %v484
  %v591 = vrot.slane %v589, 6
  %592 = vrot.lane.b32.xlu0 %v591, 64
  %v593 = vpop.permute.xlu0 %592
  %v595 = vmul.f32 %v588, %v593
  %597 = vrot.lane.b32.xlu0 %v595, 64
  %v598 = vpop.permute.xlu0 %597
  %v600 = vadd.f32 %v297, %v598
  %v601 = vtanh.pop %v600
  %v602 = vsub.f32 1.0, %v588
  %604 = vrot.lane.b32.xlu0 %v601, 96
  %v605 = vpop.permute.xlu0 %604
  %v607 = vmul.f32 %v602, %v605
  %v608 = vrot.slane %v505, 6
  %v610 = vmul.f32 %v588, %v608
  %v611 = vadd.f32 %v607, %v610
  %v613 = vrot.slane %v611, 2
  %614 = vrot.lane.b32.xlu0 %v613, 96
  %v615 = vpop.permute.xlu0 %614
  %v616 = vsel %vm49, %v615, 0
  %618 = vmatprep.subr.mxu0 0.0
  %619 = vmatpush1.msra.mxu0 %v25
  %620 = vmatprep.subr.mxu0 0.0
  %621 = vmatpush1.msra.mxu0 %v26
  %622 = vmatprep.subr.mxu0 0.0
  %623 = vmatpush1.msra.mxu0 %v27
  %624 = vmatprep.subr.mxu0 0.0
  %625 = vmatpush1.msra.mxu0 %v28
  %626 = vmatprep.subr.mxu0 0.0
  %627 = vmatpush1.msra.mxu0 0.0
  %628 = vmatprep.subr.mxu0 0.0
  %629 = vmatpush1.msra.mxu0 0.0
  %630 = vmatprep.subr.mxu0 0.0
  %631 = vmatpush1.msra.mxu0 0.0
  %632 = vmatprep.subr.mxu0 0.0
  %633 = vmatpush1.msra.mxu0 0.0
  %634 = vmatprep.subr.mxu0 0.0
  %635 = vmatpush1.msra.mxu0 0.0
  %636 = vmatprep.subr.mxu0 0.0
  %637 = vmatpush1.msra.mxu0 0.0
  %638 = vmatprep.subr.mxu0 0.0
  %639 = vmatpush1.msra.mxu0 0.0
  %640 = vmatprep.subr.mxu0 0.0
  %641 = vmatpush1.msra.mxu0 0.0
  %642 = vmatprep.subr.mxu0 0.0
  %643 = vmatpush1.msra.mxu0 0.0
  %644 = vmatprep.subr.mxu0 0.0
  %645 = vmatpush1.msra.mxu0 0.0
  %646 = vmatprep.subr.mxu0 0.0
  %647 = vmatpush1.msra.mxu0 0.0
  %648 = vmatprep.subr.mxu0 0.0
  %649 = vmatpush1.msra.mxu0 0.0
  %650 = vmatprep.subr.mxu0 0.0
  %651 = vmatpush1.msra.mxu0 0.0
  %652 = vmatprep.subr.mxu0 0.0
  %653 = vmatpush1.msra.mxu0 0.0
  %654 = vmatprep.subr.mxu0 0.0
  %655 = vmatpush1.msra.mxu0 0.0
  %656 = vmatprep.subr.mxu0 0.0
  %657 = vmatpush1.msra.mxu0 0.0
  %658 = vmatprep.subr.mxu0 0.0
  %659 = vmatpush1.msra.mxu0 0.0
  %660 = vmatprep.subr.mxu0 0.0
  %661 = vmatpush1.msra.mxu0 0.0
  %662 = vmatprep.subr.mxu0 0.0
  %663 = vmatpush1.msra.mxu0 0.0
  %664 = vmatprep.subr.mxu0 0.0
  %665 = vmatpush1.msra.mxu0 0.0
  %666 = vmatprep.subr.mxu0 0.0
  %667 = vmatpush1.msra.mxu0 0.0
  %668 = vmatprep.subr.mxu0 0.0
  %669 = vmatpush1.msra.mxu0 0.0
  %670 = vmatprep.subr.mxu0 0.0
  %671 = vmatpush1.msra.mxu0 0.0
  %672 = vmatprep.subr.mxu0 0.0
  %673 = vmatpush1.msra.mxu0 0.0
  %674 = vmatprep.subr.mxu0 0.0
  %675 = vmatpush1.msra.mxu0 0.0
  %676 = vmatprep.subr.mxu0 0.0
  %677 = vmatpush1.msra.mxu0 0.0
  %678 = vmatprep.subr.mxu0 0.0
  %679 = vmatpush1.msra.mxu0 0.0
  %680 = vmatprep.subr.mxu0 0.0
  %681 = vmatpush1.msra.mxu0 0.0
  %682 = vmatprep.mubr.f32.mxu0 0.0
  %683 = vmatmul.mubr.f32.gmra.mrb[0].mxu0 %v616
  %v684 = vpop.f32.mrb[0].mxu0
  %v685 = vadd.f32 0.0, %v684
  %v686 = vpop.f32.mrb[0].mxu0
  %687 = vdwg.mxu0
  %v689 = vrot.slane %v685, 4
  %v691 = vadd.f32 %v297, %v689
  %v692 = vmul.f32 %v691, 0.5
  %v693 = vtanh.pop %v692
  %v694 = vadd.f32 %v693, 1.0
  %v695 = vmul.f32 %v694, 0.5
  %v696 = vadd.f32 %v685, %v484
  %v698 = vrot.slane %v696, 4
  %699 = vrot.lane.b32.xlu0 %v698, 64
  %v700 = vpop.permute.xlu0 %699
  %v702 = vmul.f32 %v695, %v700
  %704 = vrot.lane.b32.xlu0 %v702, 64
  %v705 = vpop.permute.xlu0 %704
  %v707 = vadd.f32 %v297, %v705
  %v708 = vtanh.pop %v707
  %v709 = vsub.f32 1.0, %v695
  %711 = vrot.lane.b32.xlu0 %v708, 96
  %v712 = vpop.permute.xlu0 %711
  %v714 = vmul.f32 %v709, %v712
  %v715 = vrot.slane %v611, 6
  %v717 = vmul.f32 %v695, %v715
  %v718 = vadd.f32 %v714, %v717
  %v720 = vrot.slane %v718, 4
  %721 = vrot.lane.b32.xlu0 %v720, 96
  %v722 = vpop.permute.xlu0 %721
  %v723 = vsel %vm49, %v722, 0
  %725 = vmatprep.subr.mxu0 0.0
  %726 = vmatpush1.msra.mxu0 %v25
  %727 = vmatprep.subr.mxu0 0.0
  %728 = vmatpush1.msra.mxu0 %v26
  %729 = vmatprep.subr.mxu0 0.0
  %730 = vmatpush1.msra.mxu0 %v27
  %731 = vmatprep.subr.mxu0 0.0
  %732 = vmatpush1.msra.mxu0 %v28
  %733 = vmatprep.subr.mxu0 0.0
  %734 = vmatpush1.msra.mxu0 0.0
  %735 = vmatprep.subr.mxu0 0.0
  %736 = vmatpush1.msra.mxu0 0.0
  %737 = vmatprep.subr.mxu0 0.0
  %738 = vmatpush1.msra.mxu0 0.0
  %739 = vmatprep.subr.mxu0 0.0
  %740 = vmatpush1.msra.mxu0 0.0
  %741 = vmatprep.subr.mxu0 0.0
  %742 = vmatpush1.msra.mxu0 0.0
  %743 = vmatprep.subr.mxu0 0.0
  %744 = vmatpush1.msra.mxu0 0.0
  %745 = vmatprep.subr.mxu0 0.0
  %746 = vmatpush1.msra.mxu0 0.0
  %747 = vmatprep.subr.mxu0 0.0
  %748 = vmatpush1.msra.mxu0 0.0
  %749 = vmatprep.subr.mxu0 0.0
  %750 = vmatpush1.msra.mxu0 0.0
  %751 = vmatprep.subr.mxu0 0.0
  %752 = vmatpush1.msra.mxu0 0.0
  %753 = vmatprep.subr.mxu0 0.0
  %754 = vmatpush1.msra.mxu0 0.0
  %755 = vmatprep.subr.mxu0 0.0
  %756 = vmatpush1.msra.mxu0 0.0
  %757 = vmatprep.subr.mxu0 0.0
  %758 = vmatpush1.msra.mxu0 0.0
  %759 = vmatprep.subr.mxu0 0.0
  %760 = vmatpush1.msra.mxu0 0.0
  %761 = vmatprep.subr.mxu0 0.0
  %762 = vmatpush1.msra.mxu0 0.0
  %763 = vmatprep.subr.mxu0 0.0
  %764 = vmatpush1.msra.mxu0 0.0
  %765 = vmatprep.subr.mxu0 0.0
  %766 = vmatpush1.msra.mxu0 0.0
  %767 = vmatprep.subr.mxu0 0.0
  %768 = vmatpush1.msra.mxu0 0.0
  %769 = vmatprep.subr.mxu0 0.0
  %770 = vmatpush1.msra.mxu0 0.0
  %771 = vmatprep.subr.mxu0 0.0
  %772 = vmatpush1.msra.mxu0 0.0
  %773 = vmatprep.subr.mxu0 0.0
  %774 = vmatpush1.msra.mxu0 0.0
  %775 = vmatprep.subr.mxu0 0.0
  %776 = vmatpush1.msra.mxu0 0.0
  %777 = vmatprep.subr.mxu0 0.0
  %778 = vmatpush1.msra.mxu0 0.0
  %779 = vmatprep.subr.mxu0 0.0
  %780 = vmatpush1.msra.mxu0 0.0
  %781 = vmatprep.subr.mxu0 0.0
  %782 = vmatpush1.msra.mxu0 0.0
  %783 = vmatprep.subr.mxu0 0.0
  %784 = vmatpush1.msra.mxu0 0.0
  %785 = vmatprep.subr.mxu0 0.0
  %786 = vmatpush1.msra.mxu0 0.0
  %787 = vmatprep.subr.mxu0 0.0
  %788 = vmatpush1.msra.mxu0 0.0
  %789 = vmatprep.mubr.f32.mxu0 0.0
  %790 = vmatmul.mubr.f32.gmra.mrb[0].mxu0 %v723
  %v791 = vpop.f32.mrb[0].mxu0
  %v792 = vadd.f32 0.0, %v791
  %v793 = vpop.f32.mrb[0].mxu0
  %794 = vdwg.mxu0
  %v796 = vrot.slane %v792, 2
  %v798 = vadd.f32 %v297, %v796
  %v799 = vmul.f32 %v798, 0.5
  %v800 = vtanh.pop %v799
  %v801 = vadd.f32 %v800, 1.0
  %v802 = vmul.f32 %v801, 0.5
  %v803 = vadd.f32 %v792, %v484
  %v805 = vrot.slane %v803, 2
  %806 = vrot.lane.b32.xlu0 %v805, 64
  %v807 = vpop.permute.xlu0 %806
  %v809 = vmul.f32 %v802, %v807
  %811 = vrot.lane.b32.xlu0 %v809, 64
  %v812 = vpop.permute.xlu0 %811
  %v814 = vadd.f32 %v297, %v812
  %v815 = vtanh.pop %v814
  %v816 = vsub.f32 1.0, %v802
  %818 = vrot.lane.b32.xlu0 %v815, 96
  %v819 = vpop.permute.xlu0 %818
  %v821 = vmul.f32 %v816, %v819
  %v822 = vrot.slane %v718, 6
  %v824 = vmul.f32 %v802, %v822
  %v825 = vadd.f32 %v821, %v824
  %v827 = vrot.slane %v825, 6
  %828 = vrot.lane.b32.xlu0 %v827, 96
  %v829 = vpop.permute.xlu0 %828
  %v830 = vsel %vm49, %v829, 0
  %832 = vmatprep.subr.mxu0 0.0
  %833 = vmatpush1.msra.mxu0 %v25
  %834 = vmatprep.subr.mxu0 0.0
  %835 = vmatpush1.msra.mxu0 %v26
  %836 = vmatprep.subr.mxu0 0.0
  %837 = vmatpush1.msra.mxu0 %v27
  %838 = vmatprep.subr.mxu0 0.0
  %839 = vmatpush1.msra.mxu0 %v28
  %840 = vmatprep.subr.mxu0 0.0
  %841 = vmatpush1.msra.mxu0 0.0
  %842 = vmatprep.subr.mxu0 0.0
  %843 = vmatpush1.msra.mxu0 0.0
  %844 = vmatprep.subr.mxu0 0.0
  %845 = vmatpush1.msra.mxu0 0.0
  %846 = vmatprep.subr.mxu0 0.0
  %847 = vmatpush1.msra.mxu0 0.0
  %848 = vmatprep.subr.mxu0 0.0
  %849 = vmatpush1.msra.mxu0 0.0
  %850 = vmatprep.subr.mxu0 0.0
  %851 = vmatpush1.msra.mxu0 0.0
  %852 = vmatprep.subr.mxu0 0.0
  %853 = vmatpush1.msra.mxu0 0.0
  %854 = vmatprep.subr.mxu0 0.0
  %855 = vmatpush1.msra.mxu0 0.0
  %856 = vmatprep.subr.mxu0 0.0
  %857 = vmatpush1.msra.mxu0 0.0
  %858 = vmatprep.subr.mxu0 0.0
  %859 = vmatpush1.msra.mxu0 0.0
  %860 = vmatprep.subr.mxu0 0.0
  %861 = vmatpush1.msra.mxu0 0.0
  %862 = vmatprep.subr.mxu0 0.0
  %863 = vmatpush1.msra.mxu0 0.0
  %864 = vmatprep.subr.mxu0 0.0
  %865 = vmatpush1.msra.mxu0 0.0
  %866 = vmatprep.subr.mxu0 0.0
  %867 = vmatpush1.msra.mxu0 0.0
  %868 = vmatprep.subr.mxu0 0.0
  %869 = vmatpush1.msra.mxu0 0.0
  %870 = vmatprep.subr.mxu0 0.0
  %871 = vmatpush1.msra.mxu0 0.0
  %872 = vmatprep.subr.mxu0 0.0
  %873 = vmatpush1.msra.mxu0 0.0
  %874 = vmatprep.subr.mxu0 0.0
  %875 = vmatpush1.msra.mxu0 0.0
  %876 = vmatprep.subr.mxu0 0.0
  %877 = vmatpush1.msra.mxu0 0.0
  %878 = vmatprep.subr.mxu0 0.0
  %879 = vmatpush1.msra.mxu0 0.0
  %880 = vmatprep.subr.mxu0 0.0
  %881 = vmatpush1.msra.mxu0 0.0
  %882 = vmatprep.subr.mxu0 0.0
  %883 = vmatpush1.msra.mxu0 0.0
  %884 = vmatprep.subr.mxu0 0.0
  %885 = vmatpush1.msra.mxu0 0.0
  %886 = vmatprep.subr.mxu0 0.0
  %887 = vmatpush1.msra.mxu0 0.0
  %888 = vmatprep.subr.mxu0 0.0
  %889 = vmatpush1.msra.mxu0 0.0
  %890 = vmatprep.subr.mxu0 0.0
  %891 = vmatpush1.msra.mxu0 0.0
  %892 = vmatprep.subr.mxu0 0.0
  %893 = vmatpush1.msra.mxu0 0.0
  %894 = vmatprep.subr.mxu0 0.0
  %895 = vmatpush1.msra.mxu0 0.0
  %896 = vmatprep.mubr.f32.mxu0 0.0
  %897 = vmatmul.mubr.f32.gmra.mrb[0].mxu0 %v830
  %v898 = vpop.f32.mrb[0].mxu0
  %v899 = vadd.f32 0.0, %v898
  %v900 = vpop.f32.mrb[0].mxu0
  %901 = vdwg.mxu0
  %v902 = vadd.f32 %v302, %v899
  %v903 = vmul.f32 %v902, 0.5
  %v904 = vtanh.pop %v903
  %v905 = vadd.f32 %v904, 1.0
  %v906 = vmul.f32 %v905, 0.5
  %v907 = vadd.f32 %v899, %v484
  %909 = vrot.lane.b32.xlu0 %v907, 64
  %v910 = vpop.permute.xlu0 %909
  %v912 = vmul.f32 %v906, %v910
  %914 = vrot.lane.b32.xlu0 %v912, 64
  %v915 = vpop.permute.xlu0 %914
  %v917 = vadd.f32 %v302, %v915
  %v918 = vtanh.pop %v917
  %v919 = vsub.f32 1.0, %v906
  %921 = vrot.lane.b32.xlu0 %v918, 96
  %v922 = vpop.permute.xlu0 %921
  %v924 = vmul.f32 %v919, %v922
  %v926 = vmul.f32 %v906, %v827
  %v927 = vadd.f32 %v924, %v926
  %929 = vrot.lane.b32.xlu0 %v927, 96
  %v930 = vpop.permute.xlu0 %929
  %v931 = vsel %vm49, %v930, 0
  %933 = vmatprep.subr.mxu0 0.0
  %934 = vmatpush1.msra.mxu0 %v25
  %935 = vmatprep.subr.mxu0 0.0
  %936 = vmatpush1.msra.mxu0 %v26
  %937 = vmatprep.subr.mxu0 0.0
  %938 = vmatpush1.msra.mxu0 %v27
  %939 = vmatprep.subr.mxu0 0.0
  %940 = vmatpush1.msra.mxu0 %v28
  %941 = vmatprep.subr.mxu0 0.0
  %942 = vmatpush1.msra.mxu0 0.0
  %943 = vmatprep.subr.mxu0 0.0
  %944 = vmatpush1.msra.mxu0 0.0
  %945 = vmatprep.subr.mxu0 0.0
  %946 = vmatpush1.msra.mxu0 0.0
  %947 = vmatprep.subr.mxu0 0.0
  %948 = vmatpush1.msra.mxu0 0.0
  %949 = vmatprep.subr.mxu0 0.0
  %950 = vmatpush1.msra.mxu0 0.0
  %951 = vmatprep.subr.mxu0 0.0
  %952 = vmatpush1.msra.mxu0 0.0
  %953 = vmatprep.subr.mxu0 0.0
  %954 = vmatpush1.msra.mxu0 0.0
  %955 = vmatprep.subr.mxu0 0.0
  %956 = vmatpush1.msra.mxu0 0.0
  %957 = vmatprep.subr.mxu0 0.0
  %958 = vmatpush1.msra.mxu0 0.0
  %959 = vmatprep.subr.mxu0 0.0
  %960 = vmatpush1.msra.mxu0 0.0
  %961 = vmatprep.subr.mxu0 0.0
  %962 = vmatpush1.msra.mxu0 0.0
  %963 = vmatprep.subr.mxu0 0.0
  %964 = vmatpush1.msra.mxu0 0.0
  %965 = vmatprep.subr.mxu0 0.0
  %966 = vmatpush1.msra.mxu0 0.0
  %967 = vmatprep.subr.mxu0 0.0
  %968 = vmatpush1.msra.mxu0 0.0
  %969 = vmatprep.subr.mxu0 0.0
  %970 = vmatpush1.msra.mxu0 0.0
  %971 = vmatprep.subr.mxu0 0.0
  %972 = vmatpush1.msra.mxu0 0.0
  %973 = vmatprep.subr.mxu0 0.0
  %974 = vmatpush1.msra.mxu0 0.0
  %975 = vmatprep.subr.mxu0 0.0
  %976 = vmatpush1.msra.mxu0 0.0
  %977 = vmatprep.subr.mxu0 0.0
  %978 = vmatpush1.msra.mxu0 0.0
  %979 = vmatprep.subr.mxu0 0.0
  %980 = vmatpush1.msra.mxu0 0.0
  %981 = vmatprep.subr.mxu0 0.0
  %982 = vmatpush1.msra.mxu0 0.0
  %983 = vmatprep.subr.mxu0 0.0
  %984 = vmatpush1.msra.mxu0 0.0
  %985 = vmatprep.subr.mxu0 0.0
  %986 = vmatpush1.msra.mxu0 0.0
  %987 = vmatprep.subr.mxu0 0.0
  %988 = vmatpush1.msra.mxu0 0.0
  %989 = vmatprep.subr.mxu0 0.0
  %990 = vmatpush1.msra.mxu0 0.0
  %991 = vmatprep.subr.mxu0 0.0
  %992 = vmatpush1.msra.mxu0 0.0
  %993 = vmatprep.subr.mxu0 0.0
  %994 = vmatpush1.msra.mxu0 0.0
  %995 = vmatprep.subr.mxu0 0.0
  %996 = vmatpush1.msra.mxu0 0.0
  %997 = vmatprep.mubr.f32.mxu0 0.0
  %998 = vmatmul.mubr.f32.gmra.mrb[0].mxu0 %v931
  %v999 = vpop.f32.mrb[0].mxu0
  %v1000 = vadd.f32 0.0, %v999
  %v1001 = vpop.f32.mrb[0].mxu0
  %1002 = vdwg.mxu0
  %v1004 = vrot.slane %v1000, 6
  %v1006 = vadd.f32 %v302, %v1004
  %v1007 = vmul.f32 %v1006, 0.5
  %v1008 = vtanh.pop %v1007
  %v1009 = vadd.f32 %v1008, 1.0
  %v1010 = vmul.f32 %v1009, 0.5
  %v1011 = vadd.f32 %v1000, %v484
  %v1013 = vrot.slane %v1011, 6
  %1014 = vrot.lane.b32.xlu0 %v1013, 64
  %v1015 = vpop.permute.xlu0 %1014
  %v1017 = vmul.f32 %v1010, %v1015
  %1019 = vrot.lane.b32.xlu0 %v1017, 64
  %v1020 = vpop.permute.xlu0 %1019
  %v1022 = vadd.f32 %v302, %v1020
  %v1023 = vtanh.pop %v1022
  %v1024 = vsub.f32 1.0, %v1010
  %1026 = vrot.lane.b32.xlu0 %v1023, 96
  %v1027 = vpop.permute.xlu0 %1026
  %v1029 = vmul.f32 %v1024, %v1027
  %v1030 = vrot.slane %v927, 6
  %v1032 = vmul.f32 %v1010, %v1030
  %v1033 = vadd.f32 %v1029, %v1032
  %v1035 = vrot.slane %v1033, 2
  %1036 = vrot.lane.b32.xlu0 %v1035, 96
  %v1037 = vpop.permute.xlu0 %1036
  %v1038 = vsel %vm49, %v1037, 0
  %1040 = vmatprep.subr.mxu0 0.0
  %1041 = vmatpush1.msra.mxu0 %v25
  %1042 = vmatprep.subr.mxu0 0.0
  %1043 = vmatpush1.msra.mxu0 %v26
  %1044 = vmatprep.subr.mxu0 0.0
  %1045 = vmatpush1.msra.mxu0 %v27
  %1046 = vmatprep.subr.mxu0 0.0
  %1047 = vmatpush1.msra.mxu0 %v28
  %1048 = vmatprep.subr.mxu0 0.0
  %1049 = vmatpush1.msra.mxu0 0.0
  %1050 = vmatprep.subr.mxu0 0.0
  %1051 = vmatpush1.msra.mxu0 0.0
  %1052 = vmatprep.subr.mxu0 0.0
  %1053 = vmatpush1.msra.mxu0 0.0
  %1054 = vmatprep.subr.mxu0 0.0
  %1055 = vmatpush1.msra.mxu0 0.0
  %1056 = vmatprep.subr.mxu0 0.0
  %1057 = vmatpush1.msra.mxu0 0.0
  %1058 = vmatprep.subr.mxu0 0.0
  %1059 = vmatpush1.msra.mxu0 0.0
  %1060 = vmatprep.subr.mxu0 0.0
  %1061 = vmatpush1.msra.mxu0 0.0
  %1062 = vmatprep.subr.mxu0 0.0
  %1063 = vmatpush1.msra.mxu0 0.0
  %1064 = vmatprep.subr.mxu0 0.0
  %1065 = vmatpush1.msra.mxu0 0.0
  %1066 = vmatprep.subr.mxu0 0.0
  %1067 = vmatpush1.msra.mxu0 0.0
  %1068 = vmatprep.subr.mxu0 0.0
  %1069 = vmatpush1.msra.mxu0 0.0
  %1070 = vmatprep.subr.mxu0 0.0
  %1071 = vmatpush1.msra.mxu0 0.0
  %1072 = vmatprep.subr.mxu0 0.0
  %1073 = vmatpush1.msra.mxu0 0.0
  %1074 = vmatprep.subr.mxu0 0.0
  %1075 = vmatpush1.msra.mxu0 0.0
  %1076 = vmatprep.subr.mxu0 0.0
  %1077 = vmatpush1.msra.mxu0 0.0
  %1078 = vmatprep.subr.mxu0 0.0
  %1079 = vmatpush1.msra.mxu0 0.0
  %1080 = vmatprep.subr.mxu0 0.0
  %1081 = vmatpush1.msra.mxu0 0.0
  %1082 = vmatprep.subr.mxu0 0.0
  %1083 = vmatpush1.msra.mxu0 0.0
  %1084 = vmatprep.subr.mxu0 0.0
  %1085 = vmatpush1.msra.mxu0 0.0
  %1086 = vmatprep.subr.mxu0 0.0
  %1087 = vmatpush1.msra.mxu0 0.0
  %1088 = vmatprep.subr.mxu0 0.0
  %1089 = vmatpush1.msra.mxu0 0.0
  %1090 = vmatprep.subr.mxu0 0.0
  %1091 = vmatpush1.msra.mxu0 0.0
  %1092 = vmatprep.subr.mxu0 0.0
  %1093 = vmatpush1.msra.mxu0 0.0
  %1094 = vmatprep.subr.mxu0 0.0
  %1095 = vmatpush1.msra.mxu0 0.0
  %1096 = vmatprep.subr.mxu0 0.0
  %1097 = vmatpush1.msra.mxu0 0.0
  %1098 = vmatprep.subr.mxu0 0.0
  %1099 = vmatpush1.msra.mxu0 0.0
  %1100 = vmatprep.subr.mxu0 0.0
  %1101 = vmatpush1.msra.mxu0 0.0
  %1102 = vmatprep.subr.mxu0 0.0
  %1103 = vmatpush1.msra.mxu0 0.0
  %1104 = vmatprep.mubr.f32.mxu0 0.0
  %1105 = vmatmul.mubr.f32.gmra.mrb[0].mxu0 %v1038
  %v1106 = vpop.f32.mrb[0].mxu0
  %v1107 = vadd.f32 0.0, %v1106
  %v1108 = vpop.f32.mrb[0].mxu0
  %1109 = vdwg.mxu0
  %v1111 = vrot.slane %v1107, 4
  %v1113 = vadd.f32 %v302, %v1111
  %v1114 = vmul.f32 %v1113, 0.5
  %v1115 = vtanh.pop %v1114
  %v1116 = vadd.f32 %v1115, 1.0
  %v1117 = vmul.f32 %v1116, 0.5
  %v1118 = vadd.f32 %v1107, %v484
  %v1120 = vrot.slane %v1118, 4
  %1121 = vrot.lane.b32.xlu0 %v1120, 64
  %v1122 = vpop.permute.xlu0 %1121
  %v1124 = vmul.f32 %v1117, %v1122
  %1126 = vrot.lane.b32.xlu0 %v1124, 64
  %v1127 = vpop.permute.xlu0 %1126
  %v1129 = vadd.f32 %v302, %v1127
  %v1130 = vtanh.pop %v1129
  %v1131 = vsub.f32 1.0, %v1117
  %1133 = vrot.lane.b32.xlu0 %v1130, 96
  %v1134 = vpop.permute.xlu0 %1133
  %v1136 = vmul.f32 %v1131, %v1134
  %v1137 = vrot.slane %v1033, 6
  %v1139 = vmul.f32 %v1117, %v1137
  %v1140 = vadd.f32 %v1136, %v1139
  %v1142 = vrot.slane %v1140, 4
  %1143 = vrot.lane.b32.xlu0 %v1142, 96
  %v1144 = vpop.permute.xlu0 %1143
  %v1145 = vsel %vm49, %v1144, 0
  %1147 = vmatprep.subr.mxu0 0.0
  %1148 = vmatpush1.msra.mxu0 %v25
  %1149 = vmatprep.subr.mxu0 0.0
  %1150 = vmatpush1.msra.mxu0 %v26
  %1151 = vmatprep.subr.mxu0 0.0
  %1152 = vmatpush1.msra.mxu0 %v27
  %1153 = vmatprep.subr.mxu0 0.0
  %1154 = vmatpush1.msra.mxu0 %v28
  %1155 = vmatprep.subr.mxu0 0.0
  %1156 = vmatpush1.msra.mxu0 0.0
  %1157 = vmatprep.subr.mxu0 0.0
  %1158 = vmatpush1.msra.mxu0 0.0
  %1159 = vmatprep.subr.mxu0 0.0
  %1160 = vmatpush1.msra.mxu0 0.0
  %1161 = vmatprep.subr.mxu0 0.0
  %1162 = vmatpush1.msra.mxu0 0.0
  %1163 = vmatprep.subr.mxu0 0.0
  %1164 = vmatpush1.msra.mxu0 0.0
  %1165 = vmatprep.subr.mxu0 0.0
  %1166 = vmatpush1.msra.mxu0 0.0
  %1167 = vmatprep.subr.mxu0 0.0
  %1168 = vmatpush1.msra.mxu0 0.0
  %1169 = vmatprep.subr.mxu0 0.0
  %1170 = vmatpush1.msra.mxu0 0.0
  %1171 = vmatprep.subr.mxu0 0.0
  %1172 = vmatpush1.msra.mxu0 0.0
  %1173 = vmatprep.subr.mxu0 0.0
  %1174 = vmatpush1.msra.mxu0 0.0
  %1175 = vmatprep.subr.mxu0 0.0
  %1176 = vmatpush1.msra.mxu0 0.0
  %1177 = vmatprep.subr.mxu0 0.0
  %1178 = vmatpush1.msra.mxu0 0.0
  %1179 = vmatprep.subr.mxu0 0.0
  %1180 = vmatpush1.msra.mxu0 0.0
  %1181 = vmatprep.subr.mxu0 0.0
  %1182 = vmatpush1.msra.mxu0 0.0
  %1183 = vmatprep.subr.mxu0 0.0
  %1184 = vmatpush1.msra.mxu0 0.0
  %1185 = vmatprep.subr.mxu0 0.0
  %1186 = vmatpush1.msra.mxu0 0.0
  %1187 = vmatprep.subr.mxu0 0.0
  %1188 = vmatpush1.msra.mxu0 0.0
  %1189 = vmatprep.subr.mxu0 0.0
  %1190 = vmatpush1.msra.mxu0 0.0
  %1191 = vmatprep.subr.mxu0 0.0
  %1192 = vmatpush1.msra.mxu0 0.0
  %1193 = vmatprep.subr.mxu0 0.0
  %1194 = vmatpush1.msra.mxu0 0.0
  %1195 = vmatprep.subr.mxu0 0.0
  %1196 = vmatpush1.msra.mxu0 0.0
  %1197 = vmatprep.subr.mxu0 0.0
  %1198 = vmatpush1.msra.mxu0 0.0
  %1199 = vmatprep.subr.mxu0 0.0
  %1200 = vmatpush1.msra.mxu0 0.0
  %1201 = vmatprep.subr.mxu0 0.0
  %1202 = vmatpush1.msra.mxu0 0.0
  %1203 = vmatprep.subr.mxu0 0.0
  %1204 = vmatpush1.msra.mxu0 0.0
  %1205 = vmatprep.subr.mxu0 0.0
  %1206 = vmatpush1.msra.mxu0 0.0
  %1207 = vmatprep.subr.mxu0 0.0
  %1208 = vmatpush1.msra.mxu0 0.0
  %1209 = vmatprep.subr.mxu0 0.0
  %1210 = vmatpush1.msra.mxu0 0.0
  %1211 = vmatprep.mubr.f32.mxu0 0.0
  %1212 = vmatmul.mubr.f32.gmra.mrb[0].mxu0 %v1145
  %v1213 = vpop.f32.mrb[0].mxu0
  %v1214 = vadd.f32 0.0, %v1213
  %v1215 = vpop.f32.mrb[0].mxu0
  %1216 = vdwg.mxu0
  %v1218 = vrot.slane %v1214, 2
  %v1220 = vadd.f32 %v302, %v1218
  %v1221 = vmul.f32 %v1220, 0.5
  %v1222 = vtanh.pop %v1221
  %v1223 = vadd.f32 %v1222, 1.0
  %v1224 = vmul.f32 %v1223, 0.5
  %v1225 = vadd.f32 %v1214, %v484
  %v1227 = vrot.slane %v1225, 2
  %1228 = vrot.lane.b32.xlu0 %v1227, 64
  %v1229 = vpop.permute.xlu0 %1228
  %v1231 = vmul.f32 %v1224, %v1229
  %1233 = vrot.lane.b32.xlu0 %v1231, 64
  %v1234 = vpop.permute.xlu0 %1233
  %v1236 = vadd.f32 %v302, %v1234
  %v1237 = vtanh.pop %v1236
  %v1238 = vsub.f32 1.0, %v1224
  %1240 = vrot.lane.b32.xlu0 %v1237, 96
  %v1241 = vpop.permute.xlu0 %1240
  %v1243 = vmul.f32 %v1238, %v1241
  %v1244 = vrot.slane %v1140, 6
  %v1246 = vmul.f32 %v1224, %v1244
  %v1247 = vadd.f32 %v1243, %v1246
  %v1249 = vrot.slane %v1247, 6
  %vm1250 = vcmask 1041408
  %v1251 = vsel %vm1250, %v399, %v608
  %vm1252 = vcmask 1043456
  %v1253 = vsel %vm1252, %v1251, %v715
  %vm1254 = vcmask 1045504
  %v1255 = vsel %vm1254, %v1253, %v822
  %v1256 = vsel %vm1250, %v827, %v1030
  %v1257 = vsel %vm1252, %v1256, %v1137
  %v1258 = vsel %vm1254, %v1257, %v1244
  %v1259 = vlaneseq
  %v1260 = vshrl.u32 %v1259, 7
  %v1261 = vsub.s32 0, %v1260
  %v1262 = vrot.slane %v41, %v1261
  %1265 = vrot.lane.b32.xlu0 %v1255, 96
  %v1266 = vpop.permute.xlu0 %1265
  %1267 = vrot.lane.b32.xlu0 %v1258, 96
  %v1268 = vpop.permute.xlu0 %1267
  %1269 = vrot.lane.b32.xlu0 %v1249, 96
  %v1270 = vpop.permute.xlu0 %1269
  %v1271 = vsel %vm49, %v1266, 0
  %v1273 = vsel %vm49, %v1268, 0
  %v1275 = vsel %vm49, %v1270, 0
  %1277 = vmatprep.subr.mxu0 0.0
  %1278 = vmatpush1.msra.mxu0 %v29
  %1279 = vmatprep.subr.mxu0 0.0
  %1280 = vmatpush1.msra.mxu0 %v30
  %1281 = vmatprep.subr.mxu0 0.0
  %1282 = vmatpush1.msra.mxu0 %v31
  %1283 = vmatprep.subr.mxu0 0.0
  %1284 = vmatpush1.msra.mxu0 %v32
  %1285 = vmatprep.subr.mxu0 0.0
  %1286 = vmatpush1.msra.mxu0 0.0
  %1287 = vmatprep.subr.mxu0 0.0
  %1288 = vmatpush1.msra.mxu0 0.0
  %1289 = vmatprep.subr.mxu0 0.0
  %1290 = vmatpush1.msra.mxu0 0.0
  %1291 = vmatprep.subr.mxu0 0.0
  %1292 = vmatpush1.msra.mxu0 0.0
  %1293 = vmatprep.subr.mxu0 0.0
  %1294 = vmatpush1.msra.mxu0 0.0
  %1295 = vmatprep.subr.mxu0 0.0
  %1296 = vmatpush1.msra.mxu0 0.0
  %1297 = vmatprep.subr.mxu0 0.0
  %1298 = vmatpush1.msra.mxu0 0.0
  %1299 = vmatprep.subr.mxu0 0.0
  %1300 = vmatpush1.msra.mxu0 0.0
  %1301 = vmatprep.subr.mxu0 0.0
  %1302 = vmatpush1.msra.mxu0 0.0
  %1303 = vmatprep.subr.mxu0 0.0
  %1304 = vmatpush1.msra.mxu0 0.0
  %1305 = vmatprep.subr.mxu0 0.0
  %1306 = vmatpush1.msra.mxu0 0.0
  %1307 = vmatprep.subr.mxu0 0.0
  %1308 = vmatpush1.msra.mxu0 0.0
  %1309 = vmatprep.subr.mxu0 0.0
  %1310 = vmatpush1.msra.mxu0 0.0
  %1311 = vmatprep.subr.mxu0 0.0
  %1312 = vmatpush1.msra.mxu0 0.0
  %1313 = vmatprep.subr.mxu0 0.0
  %1314 = vmatpush1.msra.mxu0 0.0
  %1315 = vmatprep.subr.mxu0 0.0
  %1316 = vmatpush1.msra.mxu0 0.0
  %1317 = vmatprep.subr.mxu0 0.0
  %1318 = vmatpush1.msra.mxu0 0.0
  %1319 = vmatprep.subr.mxu0 0.0
  %1320 = vmatpush1.msra.mxu0 0.0
  %1321 = vmatprep.subr.mxu0 0.0
  %1322 = vmatpush1.msra.mxu0 0.0
  %1323 = vmatprep.subr.mxu0 0.0
  %1324 = vmatpush1.msra.mxu0 0.0
  %1325 = vmatprep.subr.mxu0 0.0
  %1326 = vmatpush1.msra.mxu0 0.0
  %1327 = vmatprep.subr.mxu0 0.0
  %1328 = vmatpush1.msra.mxu0 0.0
  %1329 = vmatprep.subr.mxu0 0.0
  %1330 = vmatpush1.msra.mxu0 0.0
  %1331 = vmatprep.subr.mxu0 0.0
  %1332 = vmatpush1.msra.mxu0 0.0
  %1333 = vmatprep.subr.mxu0 0.0
  %1334 = vmatpush1.msra.mxu0 0.0
  %1335 = vmatprep.subr.mxu0 0.0
  %1336 = vmatpush1.msra.mxu0 0.0
  %1337 = vmatprep.subr.mxu0 0.0
  %1338 = vmatpush1.msra.mxu0 0.0
  %1339 = vmatprep.subr.mxu0 0.0
  %1340 = vmatpush1.msra.mxu0 0.0
  %1341 = vmatprep.mubr.f32.mxu0 0.0
  %1342 = vmatmul.mubr.f32.gmra.mrb[0].mxu0 %v1271
  %v1343 = vpop.f32.mrb[0].mxu0
  %v1344 = vadd.f32 %v1262, %v1343
  %v1345 = vpop.f32.mrb[0].mxu0
  %1346 = vmatprep.mubr.f32.mxu0 0.0
  %1347 = vmatmul.mubr.f32.gmra.mrb[0].mxu0 %v1273
  %v1348 = vpop.f32.mrb[0].mxu0
  %v1349 = vadd.f32 %v1262, %v1348
  %v1350 = vpop.f32.mrb[0].mxu0
  %1351 = vmatprep.mubr.f32.mxu0 0.0
  %1352 = vmatmul.mubr.f32.gmra.mrb[0].mxu0 %v1275
  %v1353 = vpop.f32.mrb[0].mxu0
  %v1354 = vadd.f32 %v1262, %v1353
  %v1355 = vpop.f32.mrb[0].mxu0
  %1356 = vdwg.mxu0
  %v1357 = vmax.f32 %v1344, 0.0
  %v1358 = vmax.f32 %v1349, 0.0
  %v1359 = vmax.f32 %v1354, 0.0
  %v1360 = vlaneseq
  %v1361 = vshrl.u32 %v1360, 7
  %v1362 = vsub.s32 0, %v1361
  %v1363 = vrot.slane %v42, %v1362
  %v1365 = vsel %vm49, %v1357, 0
  %v1368 = vsel %vm49, %v1358, 0
  %v1371 = vsel %vm49, %v1359, 0
  %1373 = vmatprep.subr.mxu0 0.0
  %1374 = vmatpush1.msra.mxu0 %v33
  %1375 = vmatprep.subr.mxu0 0.0
  %1376 = vmatpush1.msra.mxu0 %v34
  %1377 = vmatprep.subr.mxu0 0.0
  %1378 = vmatpush1.msra.mxu0 %v35
  %1379 = vmatprep.subr.mxu0 0.0
  %1380 = vmatpush1.msra.mxu0 %v36
  %1381 = vmatprep.subr.mxu0 0.0
  %1382 = vmatpush1.msra.mxu0 0.0
  %1383 = vmatprep.subr.mxu0 0.0
  %1384 = vmatpush1.msra.mxu0 0.0
  %1385 = vmatprep.subr.mxu0 0.0
  %1386 = vmatpush1.msra.mxu0 0.0
  %1387 = vmatprep.subr.mxu0 0.0
  %1388 = vmatpush1.msra.mxu0 0.0
  %1389 = vmatprep.subr.mxu0 0.0
  %1390 = vmatpush1.msra.mxu0 0.0
  %1391 = vmatprep.subr.mxu0 0.0
  %1392 = vmatpush1.msra.mxu0 0.0
  %1393 = vmatprep.subr.mxu0 0.0
  %1394 = vmatpush1.msra.mxu0 0.0
  %1395 = vmatprep.subr.mxu0 0.0
  %1396 = vmatpush1.msra.mxu0 0.0
  %1397 = vmatprep.subr.mxu0 0.0
  %1398 = vmatpush1.msra.mxu0 0.0
  %1399 = vmatprep.subr.mxu0 0.0
  %1400 = vmatpush1.msra.mxu0 0.0
  %1401 = vmatprep.subr.mxu0 0.0
  %1402 = vmatpush1.msra.mxu0 0.0
  %1403 = vmatprep.subr.mxu0 0.0
  %1404 = vmatpush1.msra.mxu0 0.0
  %1405 = vmatprep.subr.mxu0 0.0
  %1406 = vmatpush1.msra.mxu0 0.0
  %1407 = vmatprep.subr.mxu0 0.0
  %1408 = vmatpush1.msra.mxu0 0.0
  %1409 = vmatprep.subr.mxu0 0.0
  %1410 = vmatpush1.msra.mxu0 0.0
  %1411 = vmatprep.subr.mxu0 0.0
  %1412 = vmatpush1.msra.mxu0 0.0
  %1413 = vmatprep.subr.mxu0 0.0
  %1414 = vmatpush1.msra.mxu0 0.0
  %1415 = vmatprep.subr.mxu0 0.0
  %1416 = vmatpush1.msra.mxu0 0.0
  %1417 = vmatprep.subr.mxu0 0.0
  %1418 = vmatpush1.msra.mxu0 0.0
  %1419 = vmatprep.subr.mxu0 0.0
  %1420 = vmatpush1.msra.mxu0 0.0
  %1421 = vmatprep.subr.mxu0 0.0
  %1422 = vmatpush1.msra.mxu0 0.0
  %1423 = vmatprep.subr.mxu0 0.0
  %1424 = vmatpush1.msra.mxu0 0.0
  %1425 = vmatprep.subr.mxu0 0.0
  %1426 = vmatpush1.msra.mxu0 0.0
  %1427 = vmatprep.subr.mxu0 0.0
  %1428 = vmatpush1.msra.mxu0 0.0
  %1429 = vmatprep.subr.mxu0 0.0
  %1430 = vmatpush1.msra.mxu0 0.0
  %1431 = vmatprep.subr.mxu0 0.0
  %1432 = vmatpush1.msra.mxu0 0.0
  %1433 = vmatprep.subr.mxu0 0.0
  %1434 = vmatpush1.msra.mxu0 0.0
  %1435 = vmatprep.subr.mxu0 0.0
  %1436 = vmatpush1.msra.mxu0 0.0
  %1437 = vmatprep.mubr.f32.mxu0 0.0
  %1438 = vmatmul.mubr.f32.gmra.mrb[0].mxu0 %v1365
  %v1439 = vpop.f32.mrb[0].mxu0
  %v1440 = vadd.f32 %v1363, %v1439
  %v1441 = vpop.f32.mrb[0].mxu0
  %1442 = vmatprep.mubr.f32.mxu0 0.0
  %1443 = vmatmul.mubr.f32.gmra.mrb[0].mxu0 %v1368
  %v1444 = vpop.f32.mrb[0].mxu0
  %v1445 = vadd.f32 %v1363, %v1444
  %v1446 = vpop.f32.mrb[0].mxu0
  %1447 = vmatprep.mubr.f32.mxu0 0.0
  %1448 = vmatmul.mubr.f32.gmra.mrb[0].mxu0 %v1371
  %v1449 = vpop.f32.mrb[0].mxu0
  %v1450 = vadd.f32 %v1363, %v1449
  %v1451 = vpop.f32.mrb[0].mxu0
  %1452 = vdwg.mxu0
  %1453 = vst [vmem:[%s2] sm:$0xff] %v1440
  %1454 = vst [vmem:[%s2 + $0x8] sm:$0xff] %v1445
  %1455 = vst [vmem:[%s2 + $0x10] sm:$0x3] %v1450
  %1456 = vrot.lane.b32.xlu0 %v608, 96
  %v1457 = vpop.permute.xlu0 %1456
  %1459 = vrot.lane.b32.xlu0 %v715, 96
  %v1460 = vpop.permute.xlu0 %1459
  %1462 = vrot.lane.b32.xlu0 %v822, 96
  %v1463 = vpop.permute.xlu0 %1462
  %1466 = vrot.lane.b32.xlu0 %v1030, 96
  %v1467 = vpop.permute.xlu0 %1466
  %1469 = vrot.lane.b32.xlu0 %v1137, 96
  %v1470 = vpop.permute.xlu0 %1469
  %1472 = vrot.lane.b32.xlu0 %v1244, 96
  %v1473 = vpop.permute.xlu0 %1472
  %v1476 = vsel %vm1250, 0.0, %v1457
  %v1477 = vsel %vm1252, %v1476, %v1460
  %v1478 = vsel %vm1254, %v1477, %v1463
  %v1479 = vsel %vm1250, %v829, %v1467
  %v1480 = vsel %vm1252, %v1479, %v1470
  %v1481 = vsel %vm1254, %v1480, %v1473
  %1482 = vst.msk [vmem:[%s3] sm:$0xff] %vm49, %v1478
  %1483 = vst.msk [vmem:[%s3 + $0x8] sm:$0xff] %vm49, %v1481
  %vm1484 = vcmask 254976
  %1485 = vst.msk [vmem:[%s3 + $0x10] sm:$0x3] %vm1484, %v1270
  // Predicated region
  $region10: #{rnn_encoder_forward.1} parent=0 // pred_check
    _
  $region11: #{rnn_encoder_forward.1} parent=0 // pred_check_branch
    %1487 = sbr.rel (0) target = $region13
  $region12: #{rnn_encoder_forward.1} parent=0 // pred_region
    _
  $region13: #{rnn_encoder_forward.1} parent=0 // pred_fallthru
    _
  // Predicated region
  $region14: #{rnn_encoder_forward.1} parent=0 // pred_check
    _
  $region15: #{rnn_encoder_forward.1} parent=0 // pred_check_branch
    %1489 = sbr.rel (0) target = $region17
  $region16: #{rnn_encoder_forward.1} parent=0 // pred_region
    _
  $region17: #{rnn_encoder_forward.1} parent=0 // pred_fallthru
    _
  // Predicated region
  $region18: #{rnn_encoder_forward.1} parent=0 // pred_check
    _
  $region19: #{rnn_encoder_forward.1} parent=0 // pred_check_branch
    %1491 = sbr.rel (0) target = $region21
  $region20: #{rnn_encoder_forward.1} parent=0 // pred_region
    _
  $region21: #{rnn_encoder_forward.1} parent=0 // pred_fallthru
    _
  // Predicated region
  $region22: #{rnn_encoder_forward.1} parent=0 // pred_check
    _
  $region23: #{rnn_encoder_forward.1} parent=0 // pred_check_branch
    %1493 = sbr.rel (0) target = $region25
  $region24: #{rnn_encoder_forward.1} parent=0 // pred_region
    _
  $region25: #{rnn_encoder_forward.1} parent=0 // pred_fallthru
    _

</llo_original>
